<compile_context>
chip_gen: v5e
topology: v5e:2x2
jax: 0.10.0
libtpu: 0.0.40
codegen_flags: <defaults>
</compile_context>

<pallas_src>
import functools

import jax
import jax.numpy as jnp
from jax.experimental import pallas as pl
from jax.experimental.pallas import tpu as pltpu

# ----------------------------- configuration --------------------------------
B = 64           # batch (small demo; real model uses larger)
B_TILE = 16      # batch rows per grid step -> M = B_TILE*L = 256, grid = 4
L = 16           # sequence length (multiple of 8 -> aligned reshapes)
D = 32           # hidden size (768 in the real model)
KERNELS = (3, 4, 5)
KMAX = max(KERNELS)
NK = 16          # n_kernels (100 in the real model)
N_C = 3          # number of classes
VOCAB = 100
FEAT = len(KERNELS) * NK
LANE = 128


def _round_up(x, m):
    return (x + m - 1) // m * m


# ------------------------------ Pallas kernel --------------------------------
def _head_kernel(h_ref, w_ref, b_ref, valid_ref, fcw_ref, fcb_ref, o_ref, *,
                 kmax, b_tile, seq_len):
    """Fused TextCNN head for B_TILE batch rows.

    h_ref    : (B_TILE, L, D)          hidden states, bf16
    w_ref    : (KMAX, D, FEAT_PAD)     per-tap conv weights, bf16
                                       (slab i = tap i of every kernel size,
                                        kernel-size-major columns, zero for
                                        i >= ker and for lane padding)
    b_ref    : (1, FEAT_PAD)           concatenated conv biases, f32
    valid_ref: (L, FEAT_PAD)           1.0 at valid conv output rows else 0.0
    fcw_ref  : (FEAT_PAD, N_C_PAD)     fc1 weight, pre-transposed + zero-padded
    fcb_ref  : (1, N_C_PAD)            fc1 bias, zero-padded
    o_ref    : (B_TILE, N_C_PAD)       lane-dense logits (sliced in wrapper)
    """
    hidden = h_ref.shape[-1]
    feat_pad = w_ref.shape[-1]
    m = b_tile * seq_len

    # [B_TILE, L, D] -> [M, D].  L % 8 == 0 so the reshape is sublane-aligned.
    h_flat = h_ref[...].reshape(m, hidden)                       # bf16 [M, D]

    # Per-tap accumulation.  out[j] += h[j + i] @ W_i is realised by rolling
    # the un-shifted matmul result backward by i rows on the XLU:
    # np.roll semantics -> roll(p, M - i)[j] = p[(j + i) % M].
    # Rows that wrap (or bleed across batch rows inside the tile) only reach
    # t positions killed by the pooling mask or taps whose weight columns are
    # zero, so they never influence the output.
    acc = jnp.dot(h_flat, w_ref[0], preferred_element_type=jnp.float32)
    for i in range(1, kmax):
        p = jnp.dot(h_flat, w_ref[i], preferred_element_type=jnp.float32)
        acc = acc + pltpu.roll(p, shift=m - i, axis=0)           # f32 [M, FEAT_PAD]

    # f32 epilogue: bias + ReLU, select valid conv rows, max-pool over t.
    y = jnp.maximum(acc + b_ref[...], 0.0)
    y = y.reshape(b_tile, seq_len, feat_pad)                     # aligned split
    y = jnp.where(valid_ref[...] > 0.5, y, jnp.float32(-1e30))
    pooled = jnp.max(y, axis=1)                                  # [B_TILE, FEAT_PAD]

    # dropout: identity (eval mode).  Lane-dense fc + lane-dense store.
    logits = jnp.dot(pooled, fcw_ref[...],
                     preferred_element_type=jnp.float32) + fcb_ref[...]
    o_ref[...] = logits.astype(o_ref.dtype)


# --------------------------- wrapper-side layout ------------------------------
def _pack_conv_weights(conv_ws, kernels, kmax, hidden, feat_pad):
    """[NK, ker, D] weights -> [KMAX, D, FEAT_PAD] bf16, one slab per tap."""
    nk = conv_ws[0].shape[0]
    slabs = []
    for i in range(kmax):
        cols = []
        for w, ker in zip(conv_ws, kernels):
            if i < ker:
                cols.append(w[:, i, :].T)                        # [D, NK]
            else:
                cols.append(jnp.zeros((hidden, nk), w.dtype))    # zero tap
        slab = jnp.concatenate(cols, axis=1)                     # [D, FEAT]
        slab = jnp.pad(slab, ((0, 0), (0, feat_pad - slab.shape[1])))
        slabs.append(slab)
    return jnp.stack(slabs, axis=0).astype(jnp.bfloat16)         # [KMAX, D, FEAT_PAD]


def _build_valid_mask(seq_len, nk, kernels, feat_pad):
    """1.0 at valid conv output positions, 0.0 at invalid t.  Lane padding is
    marked valid: those columns carry exact zeros from the conv matmul and
    their fc rows are zero, so pooling them to 0 is harmless."""
    t = jnp.arange(seq_len)[:, None]                             # [L, 1]
    cols = [jnp.where(t < (seq_len - ker + 1), 1.0, 0.0) * jnp.ones((1, nk))
            for ker in kernels]
    valid = jnp.concatenate(cols, axis=1)                        # [L, FEAT]
    return jnp.pad(valid, ((0, 0), (0, feat_pad - valid.shape[1])),
                   constant_values=1.0).astype(jnp.float32)


def textcnn_head(h, conv_ws, conv_bs, fc_w, fc_b, *, kernels=KERNELS,
                 b_tile=B_TILE):
    """h: [B, L, D] f32.  Returns logits [B, N_C] f32."""
    batch, seq_len, hidden = h.shape
    n_c, feat = fc_w.shape
    kmax = max(kernels)
    feat_pad = _round_up(feat, LANE)
    ncp = _round_up(n_c, LANE)
    assert batch % b_tile == 0
    assert seq_len % 8 == 0 and seq_len >= kmax

    # All layout plumbing lives here (free), not in the kernel.
    h_bf = h.astype(jnp.bfloat16)                                # halve h DMA
    w_all = _pack_conv_weights(conv_ws, kernels, kmax, hidden, feat_pad)
    b_all = jnp.pad(jnp.concatenate(conv_bs).reshape(1, feat),
                    ((0, 0), (0, feat_pad - feat))).astype(jnp.float32)
    valid = _build_valid_mask(seq_len, conv_bs[0].shape[0], kernels, feat_pad)
    fcw_p = jnp.zeros((feat_pad, ncp), jnp.float32).at[:feat, :n_c].set(
        fc_w.T.astype(jnp.float32))
    fcb_p = jnp.zeros((1, ncp), jnp.float32).at[0, :n_c].set(
        fc_b.astype(jnp.float32))

    kernel = functools.partial(_head_kernel, kmax=kmax, b_tile=b_tile,
                               seq_len=seq_len)

    logits_pad = pl.pallas_call(
        kernel,
        out_shape=jax.ShapeDtypeStruct((batch, ncp), jnp.float32),
        grid_spec=pltpu.PrefetchScalarGridSpec(
            num_scalar_prefetch=0,
            grid=(batch // b_tile,),
            in_specs=[
                pl.BlockSpec((b_tile, seq_len, hidden), lambda g: (g, 0, 0)),
                pl.BlockSpec((kmax, hidden, feat_pad), lambda g: (0, 0, 0)),
                pl.BlockSpec((1, feat_pad), lambda g: (0, 0)),
                pl.BlockSpec((seq_len, feat_pad), lambda g: (0, 0)),
                pl.BlockSpec((feat_pad, ncp), lambda g: (0, 0)),
                pl.BlockSpec((1, ncp), lambda g: (0, 0)),
            ],
            out_specs=pl.BlockSpec((b_tile, ncp), lambda g: (g, 0)),
        ),
        # At real scale on v7x: add vmem_limit_bytes and cap b_tile for the
        # 64 MiB budget; consider pipeline_mode=pl.Buffered(1) on the constant
        # operands above.
        compiler_params=pltpu.CompilerParams(
            dimension_semantics=("parallel",)),
    )(h_bf, w_all, b_all, valid, fcw_p, fcb_p)

    return logits_pad[:, :n_c]


# ------------------------------ plain-JAX reference --------------------------
def reference_head(h, conv_ws, conv_bs, fc_w, fc_b):
    # Matches the kernel's numerics: conv inputs/weights rounded to bf16,
    # f32 accumulation, f32 epilogue and fc.
    hp = jax.lax.Precision.HIGHEST
    hb = h.astype(jnp.bfloat16).astype(jnp.float32)
    pooled_parts = []
    for w, b, ker in zip(conv_ws, conv_bs, KERNELS):
        wb = w.astype(jnp.bfloat16).astype(jnp.float32)
        t_out = h.shape[1] - ker + 1
        acc = jnp.zeros((h.shape[0], t_out, w.shape[0]), jnp.float32)
        for i in range(ker):
            acc += jnp.einsum('btd,kd->btk', hb[:, i:i + t_out, :], wb[:, i, :],
                              precision=hp)
        acc = jnp.maximum(acc + b[None, None, :], 0.0)
        pooled_parts.append(jnp.max(acc, axis=1))
    feat = jnp.concatenate(pooled_parts, axis=1)
    return jnp.dot(feat, fc_w.T, precision=hp) + fc_b[None, :]


# ------------------------------------ main ------------------------------------
if __name__ == "__main__":
    key = jax.random.PRNGKey(0)
    (k_ids, k_emb, k_w3, k_w4, k_w5, k_b3, k_b4, k_b5,
     k_fcw, k_fcb) = jax.random.split(key, 10)

    # forward() inputs
    input_ids = jax.random.randint(k_ids, (B, L), 0, VOCAB, dtype=jnp.int32)
    attention_masks = jnp.ones((B, L), dtype=jnp.int32)

    # stubbed BERT: deterministic embedding lookup -> last_hidden_state [B, L, D]
    emb_table = jax.random.normal(k_emb, (VOCAB, D), jnp.float32) * 0.1
    last_hidden_state = emb_table[input_ids]                       # [B, L, D]

    # conv / fc parameters (deterministic synthetic init)
    w3 = jax.random.normal(k_w3, (NK, KERNELS[0], D), jnp.float32) * 0.1
    w4 = jax.random.normal(k_w4, (NK, KERNELS[1], D), jnp.float32) * 0.1
    w5 = jax.random.normal(k_w5, (NK, KERNELS[2], D), jnp.float32) * 0.1
    b3 = jax.random.normal(k_b3, (NK,), jnp.float32) * 0.1
    b4 = jax.random.normal(k_b4, (NK,), jnp.float32) * 0.1
    b5 = jax.random.normal(k_b5, (NK,), jnp.float32) * 0.1
    fc_w = jax.random.normal(k_fcw, (N_C, FEAT), jnp.float32) * 0.1
    fc_b = jax.random.normal(k_fcb, (N_C,), jnp.float32) * 0.1

    conv_ws, conv_bs = (w3, w4, w5), (b3, b4, b5)

    logits = textcnn_head(last_hidden_state, conv_ws, conv_bs, fc_w, fc_b)
    logits = jax.block_until_ready(logits)

    ref = reference_head(last_hidden_state, conv_ws, conv_bs, fc_w, fc_b)
    assert logits.shape == (B, N_C)
    assert jnp.allclose(logits, ref, atol=1e-3, rtol=1e-3), (logits, ref)

    print("KERNEL_OK")
</pallas_src>

<mosaic_0001>
module attributes {stable_mosaic.version = 11 : i64} {
  func.func @_head_kernel(%arg0: i32, %arg1: memref<16x16x32xbf16, #tpu.memory_space<vmem>>, %arg2: memref<5x32x128xbf16, #tpu.memory_space<vmem>>, %arg3: memref<1x128xf32, #tpu.memory_space<vmem>>, %arg4: memref<16x128xf32, #tpu.memory_space<vmem>>, %arg5: memref<128x128xf32, #tpu.memory_space<vmem>>, %arg6: memref<1x128xf32, #tpu.memory_space<vmem>>, %arg7: memref<16x128xf32, #tpu.memory_space<vmem>>) attributes {dimension_semantics = [#tpu.dimension_semantics<parallel>], iteration_bounds = array<i64: 4>, scalar_prefetch = 0 : i64, scratch_operands = 0 : i64, tpu.core_type = #tpu.core_type<tc>, window_params = [{transform_indices = @transform_0, window_bounds = array<i64: 16, 16, 32>}, {pipeline_mode = #tpu.pipeline_mode<synchronous>, transform_indices = @transform_1, window_bounds = array<i64: 5, 32, 128>}, {pipeline_mode = #tpu.pipeline_mode<synchronous>, transform_indices = @transform_2, window_bounds = array<i64: 1, 128>}, {pipeline_mode = #tpu.pipeline_mode<synchronous>, transform_indices = @transform_3, window_bounds = array<i64: 16, 128>}, {pipeline_mode = #tpu.pipeline_mode<synchronous>, transform_indices = @transform_4, window_bounds = array<i64: 128, 128>}, {pipeline_mode = #tpu.pipeline_mode<synchronous>, transform_indices = @transform_5, window_bounds = array<i64: 1, 128>}, {transform_indices = @transform_6, window_bounds = array<i64: 16, 128>}]} {
    %c0 = arith.constant 0 : index
    %c0_0 = arith.constant 0 : index
    %c0_1 = arith.constant 0 : index
    %0 = vector.load %arg1[%c0, %c0_0, %c0_1] : memref<16x16x32xbf16, #tpu.memory_space<vmem>>, vector<16x16x32xbf16>
    %1 = vector.shape_cast %0 : vector<16x16x32xbf16> to vector<256x32xbf16>
    %c0_2 = arith.constant 0 : index
    %c0_3 = arith.constant 0 : index
    %c0_4 = arith.constant 0 : index
    %2 = vector.load %arg2[%c0_2, %c0_3, %c0_4] : memref<5x32x128xbf16, #tpu.memory_space<vmem>>, vector<1x32x128xbf16>
    %3 = vector.shape_cast %2 : vector<1x32x128xbf16> to vector<32x128xbf16>
    %cst = arith.constant dense<0.000000e+00> : vector<256x128xf32>
    %4 = tpu.matmul %1, %3, %cst {dimension_numbers = #tpu.dot_dimension_numbers<[1], [0], [0], [1], [0, 0, 1, 1], [], []>} : vector<256x32xbf16>, vector<32x128xbf16>, vector<256x128xf32> -> vector<256x128xf32>
    %c1 = arith.constant 1 : index
    %c0_5 = arith.constant 0 : index
    %c0_6 = arith.constant 0 : index
    %5 = vector.load %arg2[%c1, %c0_5, %c0_6] : memref<5x32x128xbf16, #tpu.memory_space<vmem>>, vector<1x32x128xbf16>
    %6 = vector.shape_cast %5 : vector<1x32x128xbf16> to vector<32x128xbf16>
    %cst_7 = arith.constant dense<0.000000e+00> : vector<256x128xf32>
    %7 = tpu.matmul %1, %6, %cst_7 {dimension_numbers = #tpu.dot_dimension_numbers<[1], [0], [0], [1], [0, 0, 1, 1], [], []>} : vector<256x32xbf16>, vector<32x128xbf16>, vector<256x128xf32> -> vector<256x128xf32>
    %c255_i32 = arith.constant 255 : i32
    %8 = tpu.dynamic_rotate %7 by %c255_i32 dim 0 : vector<256x128xf32>, i32 -> vector<256x128xf32>
    %9 = arith.addf %4, %8 : vector<256x128xf32>
    %c2 = arith.constant 2 : index
    %c0_8 = arith.constant 0 : index
    %c0_9 = arith.constant 0 : index
    %10 = vector.load %arg2[%c2, %c0_8, %c0_9] : memref<5x32x128xbf16, #tpu.memory_space<vmem>>, vector<1x32x128xbf16>
    %11 = vector.shape_cast %10 : vector<1x32x128xbf16> to vector<32x128xbf16>
    %cst_10 = arith.constant dense<0.000000e+00> : vector<256x128xf32>
    %12 = tpu.matmul %1, %11, %cst_10 {dimension_numbers = #tpu.dot_dimension_numbers<[1], [0], [0], [1], [0, 0, 1, 1], [], []>} : vector<256x32xbf16>, vector<32x128xbf16>, vector<256x128xf32> -> vector<256x128xf32>
    %c254_i32 = arith.constant 254 : i32
    %13 = tpu.dynamic_rotate %12 by %c254_i32 dim 0 : vector<256x128xf32>, i32 -> vector<256x128xf32>
    %14 = arith.addf %9, %13 : vector<256x128xf32>
    %c3 = arith.constant 3 : index
    %c0_11 = arith.constant 0 : index
    %c0_12 = arith.constant 0 : index
    %15 = vector.load %arg2[%c3, %c0_11, %c0_12] : memref<5x32x128xbf16, #tpu.memory_space<vmem>>, vector<1x32x128xbf16>
    %16 = vector.shape_cast %15 : vector<1x32x128xbf16> to vector<32x128xbf16>
    %cst_13 = arith.constant dense<0.000000e+00> : vector<256x128xf32>
    %17 = tpu.matmul %1, %16, %cst_13 {dimension_numbers = #tpu.dot_dimension_numbers<[1], [0], [0], [1], [0, 0, 1, 1], [], []>} : vector<256x32xbf16>, vector<32x128xbf16>, vector<256x128xf32> -> vector<256x128xf32>
    %c253_i32 = arith.constant 253 : i32
    %18 = tpu.dynamic_rotate %17 by %c253_i32 dim 0 : vector<256x128xf32>, i32 -> vector<256x128xf32>
    %19 = arith.addf %14, %18 : vector<256x128xf32>
    %c4 = arith.constant 4 : index
    %c0_14 = arith.constant 0 : index
    %c0_15 = arith.constant 0 : index
    %20 = vector.load %arg2[%c4, %c0_14, %c0_15] : memref<5x32x128xbf16, #tpu.memory_space<vmem>>, vector<1x32x128xbf16>
    %21 = vector.shape_cast %20 : vector<1x32x128xbf16> to vector<32x128xbf16>
    %cst_16 = arith.constant dense<0.000000e+00> : vector<256x128xf32>
    %22 = tpu.matmul %1, %21, %cst_16 {dimension_numbers = #tpu.dot_dimension_numbers<[1], [0], [0], [1], [0, 0, 1, 1], [], []>} : vector<256x32xbf16>, vector<32x128xbf16>, vector<256x128xf32> -> vector<256x128xf32>
    %c252_i32 = arith.constant 252 : i32
    %23 = tpu.dynamic_rotate %22 by %c252_i32 dim 0 : vector<256x128xf32>, i32 -> vector<256x128xf32>
    %24 = arith.addf %19, %23 : vector<256x128xf32>
    %c0_17 = arith.constant 0 : index
    %c0_18 = arith.constant 0 : index
    %25 = vector.load %arg3[%c0_17, %c0_18] : memref<1x128xf32, #tpu.memory_space<vmem>>, vector<1x128xf32>
    %26 = vector.broadcast %25 : vector<1x128xf32> to vector<256x128xf32>
    %27 = arith.addf %24, %26 : vector<256x128xf32>
    %cst_19 = arith.constant 0.000000e+00 : f32
    %28 = vector.broadcast %cst_19 : f32 to vector<256x128xf32>
    %29 = arith.maximumf %27, %28 : vector<256x128xf32>
    %30 = vector.shape_cast %29 : vector<256x128xf32> to vector<16x16x128xf32>
    %c0_20 = arith.constant 0 : index
    %c0_21 = arith.constant 0 : index
    %31 = vector.load %arg4[%c0_20, %c0_21] : memref<16x128xf32, #tpu.memory_space<vmem>>, vector<16x128xf32>
    %cst_22 = arith.constant 5.000000e-01 : f32
    %32 = vector.broadcast %cst_22 : f32 to vector<16x128xf32>
    %33 = arith.cmpf ogt, %31, %32 : vector<16x128xf32>
    %cst_23 = arith.constant -1.000000e+30 : f32
    %34 = vector.shape_cast %33 : vector<16x128xi1> to vector<1x16x128xi1>
    %35 = vector.broadcast %34 : vector<1x16x128xi1> to vector<16x16x128xi1>
    %36 = vector.broadcast %cst_23 : f32 to vector<16x16x128xf32>
    %37 = arith.select %35, %30, %36 : vector<16x16x128xi1>, vector<16x16x128xf32>
    %cst_24 = arith.constant dense<0xFF800000> : vector<16x128xf32>
    %38 = vector.multi_reduction <maximumf>, %37, %cst_24 [1] : vector<16x16x128xf32> to vector<16x128xf32>
    %c0_25 = arith.constant 0 : index
    %c0_26 = arith.constant 0 : index
    %39 = vector.load %arg5[%c0_25, %c0_26] : memref<128x128xf32, #tpu.memory_space<vmem>>, vector<128x128xf32>
    %cst_27 = arith.constant dense<0.000000e+00> : vector<16x128xf32>
    %40 = tpu.matmul %38, %39, %cst_27 {dimension_numbers = #tpu.dot_dimension_numbers<[1], [0], [0], [1], [0, 0, 1, 1], [], []>} : vector<16x128xf32>, vector<128x128xf32>, vector<16x128xf32> -> vector<16x128xf32>
    %c0_28 = arith.constant 0 : index
    %c0_29 = arith.constant 0 : index
    %41 = vector.load %arg6[%c0_28, %c0_29] : memref<1x128xf32, #tpu.memory_space<vmem>>, vector<1x128xf32>
    %42 = vector.broadcast %41 : vector<1x128xf32> to vector<16x128xf32>
    %43 = arith.addf %40, %42 : vector<16x128xf32>
    %c0_30 = arith.constant 0 : index
    %c0_31 = arith.constant 0 : index
    %44 = vector.load %arg7[%c0_30, %c0_31] : memref<16x128xf32, #tpu.memory_space<vmem>>, vector<16x128xf32>
    tpu.vector_store %arg7[%c0_30, %c0_31], %43 {strides = array<i32>} : memref<16x128xf32, #tpu.memory_space<vmem>>, vector<16x128xf32>,
    return
  }
  func.func @transform_0(%arg0: i32) -> (i32, i32, i32) {
    %c0_i32 = arith.constant 0 : i32
    %c0_i32_0 = arith.constant 0 : i32
    %c0_i32_1 = arith.constant 0 : i32
    return %arg0, %c0_i32, %c0_i32_0 : i32, i32, i32
  }
  func.func @transform_1(%arg0: i32) -> (i32, i32, i32) {
    %c0_i32 = arith.constant 0 : i32
    %c0_i32_0 = arith.constant 0 : i32
    %c0_i32_1 = arith.constant 0 : i32
    %c0_i32_2 = arith.constant 0 : i32
    return %c0_i32, %c0_i32_0, %c0_i32_1 : i32, i32, i32
  }
  func.func @transform_2(%arg0: i32) -> (i32, i32) {
    %c0_i32 = arith.constant 0 : i32
    %c0_i32_0 = arith.constant 0 : i32
    %c0_i32_1 = arith.constant 0 : i32
    return %c0_i32, %c0_i32_0 : i32, i32
  }
  func.func @transform_3(%arg0: i32) -> (i32, i32) {
    %c0_i32 = arith.constant 0 : i32
    %c0_i32_0 = arith.constant 0 : i32
    %c0_i32_1 = arith.constant 0 : i32
    return %c0_i32, %c0_i32_0 : i32, i32
  }
  func.func @transform_4(%arg0: i32) -> (i32, i32) {
    %c0_i32 = arith.constant 0 : i32
    %c0_i32_0 = arith.constant 0 : i32
    %c0_i32_1 = arith.constant 0 : i32
    return %c0_i32, %c0_i32_0 : i32, i32
  }
  func.func @transform_5(%arg0: i32) -> (i32, i32) {
    %c0_i32 = arith.constant 0 : i32
    %c0_i32_0 = arith.constant 0 : i32
    %c0_i32_1 = arith.constant 0 : i32
    return %c0_i32, %c0_i32_0 : i32, i32
  }
  func.func @transform_6(%arg0: i32) -> (i32, i32) {
    %c0_i32 = arith.constant 0 : i32
    %c0_i32_0 = arith.constant 0 : i32
    return %arg0, %c0_i32 : i32, i32
  }
}

</mosaic_0001>

<llo_original>
// kernel: tpu_custom_call.1
$region0: #{tpu_custom_call.1}
  #allocation0 [shape = 'u32[]', space=smem, size = 0x4, offset = 0x4, fixed_abs, tag = 'smem constant byte address 0x4 - core index']
  #allocation1 [shape = 'u32[72,128]{1,0:T(1,128)}', space=vmem, size = 0x9000, scoped, tag = 'internal scratch']
  %s0 = inlined_call_operand.vmem [shape: bf16[64,16,32], index: 0, kind: input, shape index: {}]
  %s1 = inlined_call_operand.vmem [shape: bf16[5,32,128], index: 1, kind: input, shape index: {}]
  %s2 = inlined_call_operand.vmem [shape: f32[1,128], index: 2, kind: input, shape index: {}]
  %s3 = inlined_call_operand.vmem [shape: f32[16,128], index: 3, kind: input, shape index: {}]
  %s4 = inlined_call_operand.vmem [shape: f32[128,128], index: 4, kind: input, shape index: {}]
  %s5 = inlined_call_operand.vmem [shape: f32[1,128], index: 5, kind: input, shape index: {}]
  %s6 = inlined_call_operand.hbm [shape: f32[64,128], index: 6, kind: output, shape index: {}]
  %s7 = sld [smem:[#allocation0]]
  $region57: #{tpu_custom_call.1} parent=0
    _
  %s9 = ssub.s32 1, %s7
  %s10 = scalar_select 0, %s9, %s7
  $region1: #{tpu_custom_call.1} parent=0
    #allocation2 [shape = 'u8[16384]{0}', space=vmem, size = 0x4000, scoped, tag = 'output window, operand 0']
    #allocation3 [shape = 's32[2]{0}', space=sflag, size = 0x8, scoped, tag = 'scoped memory for tpu_custom_call.1']
    %11 = vsyncpa [#allocation3], 0
    %s12 = scalar_lea.sflag [#allocation3], 1
    %13 = vsyncpa %s12, 0
    loop: start=0, step=1, limit=6
    $region2: #{tpu_custom_call.1} parent=1 // loop_pre_header
      _
    $region3: #{tpu_custom_call.1} parent=1 // loop_header
      %s15 = sphi 0, %s19
      %p16 = scmp.ge.s32.totalorder %s15, 6
      %s25 = sphi 0, %s27
      %s28 = sphi 0, %s25
      %s29 = sphi 0, %s28
      %s45 = sphi 0, %s29
      %s49 = sphi 0, %s49
      %s51 = sphi 0, %s49
      %s52 = sphi 0, %s51
      %s66 = sphi 0, %s52
      %s70 = sphi 0, %s70
      %s72 = sphi 0, %s70
      %s73 = sphi 0, %s72
      %s87 = sphi 0, %s73
      %s91 = sphi 0, %s91
      %s93 = sphi 0, %s91
      %s94 = sphi 0, %s93
      %s108 = sphi 0, %s94
      %s112 = sphi 0, %s112
      %s114 = sphi 0, %s112
      %s115 = sphi 0, %s114
      %s129 = sphi 0, %s115
      %s133 = sphi 0, %s133
      %s135 = sphi 0, %s133
      %s136 = sphi 0, %s135
      %s150 = sphi 0, %s136
      %s156 = sphi 0, %s158
      %s159 = sphi 0, %s156
      %s160 = sphi 0, %s159
      %s176 = sphi 0, %s160
    $region4: #{tpu_custom_call.1} parent=1 // loop_header_branch
      %18 = sbr.rel (%p16) target = $region8
    $region5: #{tpu_custom_call.1} parent=1 // loop_body
      %s20 = ssub.s32 %s15, 1
      %s21 = ssub.s32 %s15, 2
      %s22 = sadd.s32 %s15, 1
      %s23 = ssub.s32 %s15, %s22
      %p24 = scmp.eq.s32.totalorder %s23, 0
      %s26 = sadd.s32 %s25, 1
      %s27 = scalar_select %p24, %s25, %s26
      %p30 = pneg %p24
      %p31 = scmp.eq.s32.totalorder %s15, 3
      %p32 = por %p30, %p31
      %p33 = scmp.ne.s32.totalorder %s25, %s28
      %p34 = scmp.eq.s32.totalorder %s15, 0
      %p35 = por %p33, %p34
      %p36 = scmp.ne.s32.totalorder %s25, %s28
      %p37 = scmp.eq.s32.totalorder %s20, 3
      %p38 = por %p36, %p37
      %p39 = scmp.ne.s32.totalorder %s28, %s29
      %p40 = scmp.eq.s32.totalorder %s20, 0
      %p41 = por %p39, %p40
      %p42 = scmp.ne.s32.totalorder %s28, %s29
      %p43 = scmp.eq.s32.totalorder %s21, 3
      %p44 = por %p42, %p43
      %p46 = scmp.ne.s32.totalorder %s29, %s45
      %p47 = scmp.eq.s32.totalorder %s21, 0
      %p48 = por %p46, %p47
      %s50 = sadd.s32 %s49, 1
      %p53 = scmp.eq.s32.totalorder %s15, 3
      %p54 = scmp.ne.s32.totalorder %s49, %s51
      %p55 = scmp.eq.s32.totalorder %s15, 0
      %p56 = por %p54, %p55
      %p57 = scmp.ne.s32.totalorder %s49, %s51
      %p58 = scmp.eq.s32.totalorder %s20, 3
      %p59 = por %p57, %p58
      %p60 = scmp.ne.s32.totalorder %s51, %s52
      %p61 = scmp.eq.s32.totalorder %s20, 0
      %p62 = por %p60, %p61
      %p63 = scmp.ne.s32.totalorder %s51, %s52
      %p64 = scmp.eq.s32.totalorder %s21, 3
      %p65 = por %p63, %p64
      %p67 = scmp.ne.s32.totalorder %s52, %s66
      %p68 = scmp.eq.s32.totalorder %s21, 0
      %p69 = por %p67, %p68
      %s71 = sadd.s32 %s70, 1
      %p74 = scmp.eq.s32.totalorder %s15, 3
      %p75 = scmp.ne.s32.totalorder %s70, %s72
      %p76 = scmp.eq.s32.totalorder %s15, 0
      %p77 = por %p75, %p76
      %p78 = scmp.ne.s32.totalorder %s70, %s72
      %p79 = scmp.eq.s32.totalorder %s20, 3
      %p80 = por %p78, %p79
      %p81 = scmp.ne.s32.totalorder %s72, %s73
      %p82 = scmp.eq.s32.totalorder %s20, 0
      %p83 = por %p81, %p82
      %p84 = scmp.ne.s32.totalorder %s72, %s73
      %p85 = scmp.eq.s32.totalorder %s21, 3
      %p86 = por %p84, %p85
      %p88 = scmp.ne.s32.totalorder %s73, %s87
      %p89 = scmp.eq.s32.totalorder %s21, 0
      %p90 = por %p88, %p89
      %s92 = sadd.s32 %s91, 1
      %p95 = scmp.eq.s32.totalorder %s15, 3
      %p96 = scmp.ne.s32.totalorder %s91, %s93
      %p97 = scmp.eq.s32.totalorder %s15, 0
      %p98 = por %p96, %p97
      %p99 = scmp.ne.s32.totalorder %s91, %s93
      %p100 = scmp.eq.s32.totalorder %s20, 3
      %p101 = por %p99, %p100
      %p102 = scmp.ne.s32.totalorder %s93, %s94
      %p103 = scmp.eq.s32.totalorder %s20, 0
      %p104 = por %p102, %p103
      %p105 = scmp.ne.s32.totalorder %s93, %s94
      %p106 = scmp.eq.s32.totalorder %s21, 3
      %p107 = por %p105, %p106
      %p109 = scmp.ne.s32.totalorder %s94, %s108
      %p110 = scmp.eq.s32.totalorder %s21, 0
      %p111 = por %p109, %p110
      %s113 = sadd.s32 %s112, 1
      %p116 = scmp.eq.s32.totalorder %s15, 3
      %p117 = scmp.ne.s32.totalorder %s112, %s114
      %p118 = scmp.eq.s32.totalorder %s15, 0
      %p119 = por %p117, %p118
      %p120 = scmp.ne.s32.totalorder %s112, %s114
      %p121 = scmp.eq.s32.totalorder %s20, 3
      %p122 = por %p120, %p121
      %p123 = scmp.ne.s32.totalorder %s114, %s115
      %p124 = scmp.eq.s32.totalorder %s20, 0
      %p125 = por %p123, %p124
      %p126 = scmp.ne.s32.totalorder %s114, %s115
      %p127 = scmp.eq.s32.totalorder %s21, 3
      %p128 = por %p126, %p127
      %p130 = scmp.ne.s32.totalorder %s115, %s129
      %p131 = scmp.eq.s32.totalorder %s21, 0
      %p132 = por %p130, %p131
      %s134 = sadd.s32 %s133, 1
      %p137 = scmp.eq.s32.totalorder %s15, 3
      %p138 = scmp.ne.s32.totalorder %s133, %s135
      %p139 = scmp.eq.s32.totalorder %s15, 0
      %p140 = por %p138, %p139
      %p141 = scmp.ne.s32.totalorder %s133, %s135
      %p142 = scmp.eq.s32.totalorder %s20, 3
      %p143 = por %p141, %p142
      %p144 = scmp.ne.s32.totalorder %s135, %s136
      %p145 = scmp.eq.s32.totalorder %s20, 0
      %p146 = por %p144, %p145
      %p147 = scmp.ne.s32.totalorder %s135, %s136
      %p148 = scmp.eq.s32.totalorder %s21, 3
      %p149 = por %p147, %p148
      %p151 = scmp.ne.s32.totalorder %s136, %s150
      %p152 = scmp.eq.s32.totalorder %s21, 0
      %p153 = por %p151, %p152
      %s154 = ssub.s32 %s15, %s22
      %p155 = scmp.eq.s32.totalorder %s154, 0
      %s157 = sadd.s32 %s156, 1
      %s158 = scalar_select %p155, %s156, %s157
      %p161 = pneg %p155
      %p162 = scmp.eq.s32.totalorder %s15, 3
      %p163 = por %p161, %p162
      %p164 = scmp.ne.s32.totalorder %s156, %s159
      %p165 = scmp.eq.s32.totalorder %s15, 0
      %p166 = por %p164, %p165
      %p167 = scmp.ne.s32.totalorder %s156, %s159
      %p168 = scmp.eq.s32.totalorder %s20, 3
      %p169 = por %p167, %p168
      %p170 = scmp.ne.s32.totalorder %s159, %s160
      %p171 = scmp.eq.s32.totalorder %s20, 0
      %p172 = por %p170, %p171
      %p173 = scmp.ne.s32.totalorder %s159, %s160
      %p174 = scmp.eq.s32.totalorder %s21, 3
      %p175 = por %p173, %p174
      %p177 = scmp.ne.s32.totalorder %s160, %s176
      %p178 = scmp.eq.s32.totalorder %s21, 0
      %p179 = por %p177, %p178
      %p180 = scmp.le.s32.totalorder 1, %s15
      %p181 = scmp.lt.s32.totalorder %s15, 5
      %p182 = pnand %p180, %p181
      %p183 = pneg %p182
      // Predicated region
      $region9: #{tpu_custom_call.1} parent=5 // pred_check
        _
      $region10: #{tpu_custom_call.1} parent=5 // pred_check_branch
        %185 = sbr.rel (%p182) target = $region12
      $region11: #{tpu_custom_call.1} parent=5 // pred_region
        %s186 = ssub.s32 %s15, 1
        // Predicated region
        $region13: #{tpu_custom_call.1} parent=11 // pred_check
          %p187 = pneg %p62
        $region14: #{tpu_custom_call.1} parent=11 // pred_check_branch
          %189 = sbr.rel (%p187) target = $region16
        $region15: #{tpu_custom_call.1} parent=11 // pred_region
          _
        $region16: #{tpu_custom_call.1} parent=11 // pred_fallthru
          _
        // Predicated region
        $region17: #{tpu_custom_call.1} parent=11 // pred_check
          %p190 = pneg %p83
        $region18: #{tpu_custom_call.1} parent=11 // pred_check_branch
          %192 = sbr.rel (%p190) target = $region20
        $region19: #{tpu_custom_call.1} parent=11 // pred_region
          _
        $region20: #{tpu_custom_call.1} parent=11 // pred_fallthru
          _
        // Predicated region
        $region21: #{tpu_custom_call.1} parent=11 // pred_check
          %p193 = pneg %p104
        $region22: #{tpu_custom_call.1} parent=11 // pred_check_branch
          %195 = sbr.rel (%p193) target = $region24
        $region23: #{tpu_custom_call.1} parent=11 // pred_region
          _
        $region24: #{tpu_custom_call.1} parent=11 // pred_fallthru
          _
        // Predicated region
        $region25: #{tpu_custom_call.1} parent=11 // pred_check
          %p196 = pneg %p125
        $region26: #{tpu_custom_call.1} parent=11 // pred_check_branch
          %198 = sbr.rel (%p196) target = $region28
        $region27: #{tpu_custom_call.1} parent=11 // pred_region
          _
        $region28: #{tpu_custom_call.1} parent=11 // pred_fallthru
          _
        // Predicated region
        $region29: #{tpu_custom_call.1} parent=11 // pred_check
          %p199 = pneg %p146
        $region30: #{tpu_custom_call.1} parent=11 // pred_check_branch
          %201 = sbr.rel (%p199) target = $region32
        $region31: #{tpu_custom_call.1} parent=11 // pred_region
          _
        $region32: #{tpu_custom_call.1} parent=11 // pred_fallthru
          _
      $region12: #{tpu_custom_call.1} parent=5 // pred_fallthru
        _
      %p202 = scmp.lt.s32.totalorder %s15, 4
      // Predicated region
      $region33: #{tpu_custom_call.1} parent=5 // pred_check
        %p203 = pneg %p202
      $region34: #{tpu_custom_call.1} parent=5 // pred_check_branch
        %205 = sbr.rel (%p203) target = $region36
      $region35: #{tpu_custom_call.1} parent=5 // pred_region
        // Predicated region
        $region37: #{tpu_custom_call.1} parent=35 // pred_check
          %p206 = pneg %p35
        $region38: #{tpu_custom_call.1} parent=35 // pred_check_branch
          %208 = sbr.rel (%p206) target = $region40
        $region39: #{tpu_custom_call.1} parent=35 // pred_region
          %s209 = smul.u32 16, %s15
          %p210 = scmp.lt.s32.totalorder %s209, 63
          %s211 = scalar_select %p210, %s209, 63
          %s212 = smul.addr %s211, 2
          %s213 = smul.addr %s212, 4
          %s214 = scalar_lea.vmem %s0, %s213
          %s215 = smul.u32 16, %s15
        $region40: #{tpu_custom_call.1} parent=35 // pred_fallthru
          _
      $region36: #{tpu_custom_call.1} parent=5 // pred_fallthru
        _
      %p216 = scmp.le.s32.totalorder 1, %s15
      %p217 = scmp.lt.s32.totalorder %s15, 5
      %p218 = pnand %p216, %p217
      %p219 = pneg %p218
      // Predicated region
      $region41: #{tpu_custom_call.1} parent=5 // pred_check
        _
      $region42: #{tpu_custom_call.1} parent=5 // pred_check_branch
        %221 = sbr.rel (%p218) target = $region44
      $region43: #{tpu_custom_call.1} parent=5 // pred_region
        %s222 = ssub.s32 %s15, 1
        %s223 = smul.u32 16, %s20
        %p224 = scmp.lt.s32.totalorder %s223, 63
        %s225 = scalar_select %p224, %s223, 63
        %s226 = smul.addr %s225, 2
        %s227 = smul.addr %s226, 4
        %s228 = scalar_lea.vmem %s0, %s227
        %p229 = pneg %p41
        %p230 = pneg %p38
        %p231 = pneg %p62
        %p232 = pneg %p59
        %p233 = pneg %p83
        %p234 = pneg %p80
        %p235 = pneg %p104
        %p236 = pneg %p101
        %p237 = pneg %p125
        %p238 = pneg %p122
        %p239 = pneg %p146
        %p240 = pneg %p143
        %p241 = pneg %p172
        %p242 = pneg %p169
        %s243 = sand.u32 %s159, 1
        %s244 = scalar_lea.sflag [#allocation3], %s243
        %s245 = sand.u32 %s159, 1
        %s246 = smul.addr %s245, 16
        %s247 = scalar_lea.vmem [#allocation2], %s246
        %s248 = smul.u32 16, %s20
        %p249 = scmp.lt.s32.totalorder %s248, 63
        %s250 = scalar_select %p249, %s248, 63
        %s251 = smul.addr %s250, 2
        %s252 = smul.addr %s251, 4
        %s253 = scalar_lea.vmem %s0, %s252
        %s254 = smul.u32 16, %s20
        %s255 = smul.u32 2, %s20
        %v257 = vld [vmem:[%s253] sm:$0xf]
        %v258 = vld [vmem:[%s253 + $0x4] sm:$0xf]
        %v259 = vld [vmem:[%s253 + $0x8] sm:$0xf]
        %v260 = vld [vmem:[%s253 + $0xc] sm:$0xf]
        %v261 = vld [vmem:[%s253 + $0x10] sm:$0xf]
        %v262 = vld [vmem:[%s253 + $0x14] sm:$0xf]
        %v263 = vld [vmem:[%s253 + $0x18] sm:$0xf]
        %v264 = vld [vmem:[%s253 + $0x1c] sm:$0xf]
        %v265 = vld [vmem:[%s253 + $0x20] sm:$0xf]
        %v266 = vld [vmem:[%s253 + $0x24] sm:$0xf]
        %v267 = vld [vmem:[%s253 + $0x28] sm:$0xf]
        %v268 = vld [vmem:[%s253 + $0x2c] sm:$0xf]
        %v269 = vld [vmem:[%s253 + $0x30] sm:$0xf]
        %v270 = vld [vmem:[%s253 + $0x34] sm:$0xf]
        %v271 = vld [vmem:[%s253 + $0x38] sm:$0xf]
        %v272 = vld [vmem:[%s253 + $0x3c] sm:$0xf]
        %v273 = vld [vmem:[%s253 + $0x40] sm:$0xf]
        %v274 = vld [vmem:[%s253 + $0x44] sm:$0xf]
        %v275 = vld [vmem:[%s253 + $0x48] sm:$0xf]
        %v276 = vld [vmem:[%s253 + $0x4c] sm:$0xf]
        %v277 = vld [vmem:[%s253 + $0x50] sm:$0xf]
        %v278 = vld [vmem:[%s253 + $0x54] sm:$0xf]
        %v279 = vld [vmem:[%s253 + $0x58] sm:$0xf]
        %v280 = vld [vmem:[%s253 + $0x5c] sm:$0xf]
        %v281 = vld [vmem:[%s253 + $0x60] sm:$0xf]
        %v282 = vld [vmem:[%s253 + $0x64] sm:$0xf]
        %v283 = vld [vmem:[%s253 + $0x68] sm:$0xf]
        %v284 = vld [vmem:[%s253 + $0x6c] sm:$0xf]
        %v285 = vld [vmem:[%s253 + $0x70] sm:$0xf]
        %v286 = vld [vmem:[%s253 + $0x74] sm:$0xf]
        %v287 = vld [vmem:[%s253 + $0x78] sm:$0xf]
        %v288 = vld [vmem:[%s253 + $0x7c] sm:$0xf]
        %v289 = vld [vmem:[%s1] sm:$0xf]
        %v290 = vld [vmem:[%s1 + $0x4] sm:$0xf]
        %v291 = vld [vmem:[%s1 + $0x8] sm:$0xf]
        %v292 = vld [vmem:[%s1 + $0xc] sm:$0xf]
        %s293 = scalar_lea.vmem %s1, 16
        %v294 = vld [vmem:[%s293] sm:$0xf]
        %v295 = vld [vmem:[%s293 + $0x4] sm:$0xf]
        %v296 = vld [vmem:[%s293 + $0x8] sm:$0xf]
        %v297 = vld [vmem:[%s293 + $0xc] sm:$0xf]
        %v330 = vunpack.c.l.b16 %v257
        %v331 = vunpack.c.l.b16 %v258
        %v332 = vunpack.c.l.b16 %v259
        %v333 = vunpack.c.l.b16 %v260
        %v334 = vunpack.c.l.b16 %v261
        %v335 = vunpack.c.l.b16 %v262
        %v336 = vunpack.c.l.b16 %v263
        %v337 = vunpack.c.l.b16 %v264
        %v338 = vunpack.c.l.b16 %v265
        %v339 = vunpack.c.l.b16 %v266
        %v340 = vunpack.c.l.b16 %v267
        %v341 = vunpack.c.l.b16 %v268
        %v342 = vunpack.c.l.b16 %v269
        %v343 = vunpack.c.l.b16 %v270
        %v344 = vunpack.c.l.b16 %v271
        %v345 = vunpack.c.l.b16 %v272
        %v346 = vunpack.c.l.b16 %v273
        %v347 = vunpack.c.l.b16 %v274
        %v348 = vunpack.c.l.b16 %v275
        %v349 = vunpack.c.l.b16 %v276
        %v350 = vunpack.c.l.b16 %v277
        %v351 = vunpack.c.l.b16 %v278
        %v352 = vunpack.c.l.b16 %v279
        %v353 = vunpack.c.l.b16 %v280
        %v354 = vunpack.c.l.b16 %v281
        %v355 = vunpack.c.l.b16 %v282
        %v356 = vunpack.c.l.b16 %v283
        %v357 = vunpack.c.l.b16 %v284
        %v358 = vunpack.c.l.b16 %v285
        %v359 = vunpack.c.l.b16 %v286
        %v360 = vunpack.c.l.b16 %v287
        %v361 = vunpack.c.l.b16 %v288
        %v362 = vpack.c.b16 %v331, %v330
        %v363 = vpack.c.b16 %v333, %v332
        %v364 = vpack.c.b16 %v335, %v334
        %v365 = vpack.c.b16 %v337, %v336
        %v366 = vpack.c.b16 %v339, %v338
        %v367 = vpack.c.b16 %v341, %v340
        %v368 = vpack.c.b16 %v343, %v342
        %v369 = vpack.c.b16 %v345, %v344
        %v370 = vpack.c.b16 %v347, %v346
        %v371 = vpack.c.b16 %v349, %v348
        %v372 = vpack.c.b16 %v351, %v350
        %v373 = vpack.c.b16 %v353, %v352
        %v374 = vpack.c.b16 %v355, %v354
        %v375 = vpack.c.b16 %v357, %v356
        %v376 = vpack.c.b16 %v359, %v358
        %v377 = vpack.c.b16 %v361, %v360
        %v382 = vunpack.c.l.b16 %v294
        %v383 = vunpack.c.l.b16 %v295
        %v384 = vunpack.c.l.b16 %v296
        %v385 = vunpack.c.l.b16 %v297
        %v386 = vpack.c.b16 %v383, %v382
        %v387 = vpack.c.b16 %v385, %v384
        %vm390 = vcmask 261120
        %v392 = vsel %vm390, %v362, 0
        %v395 = vsel %vm390, %v363, 0
        %v398 = vsel %vm390, %v364, 0
        %v401 = vsel %vm390, %v365, 0
        %v404 = vsel %vm390, %v366, 0
        %v407 = vsel %vm390, %v367, 0
        %v410 = vsel %vm390, %v368, 0
        %v413 = vsel %vm390, %v369, 0
        %v416 = vsel %vm390, %v370, 0
        %v419 = vsel %vm390, %v371, 0
        %v422 = vsel %vm390, %v372, 0
        %v425 = vsel %vm390, %v373, 0
        %v428 = vsel %vm390, %v374, 0
        %v431 = vsel %vm390, %v375, 0
        %v434 = vsel %vm390, %v376, 0
        %v437 = vsel %vm390, %v377, 0
        %439 = vmatpush.bf16.msra.mxu0 0
        %440 = vmatpush.bf16.msra.mxu0 0
        %441 = vmatpush.bf16.msra.mxu0 0
        %442 = vmatpush.bf16.msra.mxu0 0
        %443 = vmatpush.bf16.msra.mxu0 0
        %444 = vmatpush.bf16.msra.mxu0 0
        %445 = vmatpush.bf16.msra.mxu0 %v387
        %446 = vmatpush.bf16.msra.mxu0 %v386
        %447 = vmatmul.bf16.gmra.mxu0 %v392
        %v448 = vpop.f32.mrf.mxu0
        %v449 = vadd.f32 0.0, %v448
        %v450 = vpop.f32.mrf.mxu0
        %v451 = vadd.f32 0.0, %v450
        %452 = vmatmul.bf16.gmra.mxu0 %v395
        %v453 = vpop.f32.mrf.mxu0
        %v454 = vadd.f32 0.0, %v453
        %v455 = vpop.f32.mrf.mxu0
        %v456 = vadd.f32 0.0, %v455
        %457 = vmatmul.bf16.gmra.mxu0 %v398
        %v458 = vpop.f32.mrf.mxu0
        %v459 = vadd.f32 0.0, %v458
        %v460 = vpop.f32.mrf.mxu0
        %v461 = vadd.f32 0.0, %v460
        %462 = vmatmul.bf16.gmra.mxu0 %v401
        %v463 = vpop.f32.mrf.mxu0
        %v464 = vadd.f32 0.0, %v463
        %v465 = vpop.f32.mrf.mxu0
        %v466 = vadd.f32 0.0, %v465
        %467 = vmatmul.bf16.gmra.mxu0 %v404
        %v468 = vpop.f32.mrf.mxu0
        %v469 = vadd.f32 0.0, %v468
        %v470 = vpop.f32.mrf.mxu0
        %v471 = vadd.f32 0.0, %v470
        %472 = vmatmul.bf16.gmra.mxu0 %v407
        %v473 = vpop.f32.mrf.mxu0
        %v474 = vadd.f32 0.0, %v473
        %v475 = vpop.f32.mrf.mxu0
        %v476 = vadd.f32 0.0, %v475
        %477 = vmatmul.bf16.gmra.mxu0 %v410
        %v478 = vpop.f32.mrf.mxu0
        %v479 = vadd.f32 0.0, %v478
        %v480 = vpop.f32.mrf.mxu0
        %v481 = vadd.f32 0.0, %v480
        %482 = vmatmul.bf16.gmra.mxu0 %v413
        %v483 = vpop.f32.mrf.mxu0
        %v484 = vadd.f32 0.0, %v483
        %v485 = vpop.f32.mrf.mxu0
        %v486 = vadd.f32 0.0, %v485
        %487 = vmatmul.bf16.gmra.mxu0 %v416
        %v488 = vpop.f32.mrf.mxu0
        %v489 = vadd.f32 0.0, %v488
        %v490 = vpop.f32.mrf.mxu0
        %v491 = vadd.f32 0.0, %v490
        %492 = vmatmul.bf16.gmra.mxu0 %v419
        %v493 = vpop.f32.mrf.mxu0
        %v494 = vadd.f32 0.0, %v493
        %v495 = vpop.f32.mrf.mxu0
        %v496 = vadd.f32 0.0, %v495
        %497 = vmatmul.bf16.gmra.mxu0 %v422
        %v498 = vpop.f32.mrf.mxu0
        %v499 = vadd.f32 0.0, %v498
        %v500 = vpop.f32.mrf.mxu0
        %v501 = vadd.f32 0.0, %v500
        %502 = vmatmul.bf16.gmra.mxu0 %v425
        %v503 = vpop.f32.mrf.mxu0
        %v504 = vadd.f32 0.0, %v503
        %v505 = vpop.f32.mrf.mxu0
        %v506 = vadd.f32 0.0, %v505
        %507 = vmatmul.bf16.gmra.mxu0 %v428
        %v508 = vpop.f32.mrf.mxu0
        %v509 = vadd.f32 0.0, %v508
        %v510 = vpop.f32.mrf.mxu0
        %v511 = vadd.f32 0.0, %v510
        %512 = vmatmul.bf16.gmra.mxu0 %v431
        %v513 = vpop.f32.mrf.mxu0
        %v514 = vadd.f32 0.0, %v513
        %v515 = vpop.f32.mrf.mxu0
        %v516 = vadd.f32 0.0, %v515
        %517 = vmatmul.bf16.gmra.mxu0 %v434
        %v518 = vpop.f32.mrf.mxu0
        %v519 = vadd.f32 0.0, %v518
        %v520 = vpop.f32.mrf.mxu0
        %v521 = vadd.f32 0.0, %v520
        %522 = vmatmul.bf16.gmra.mxu0 %v437
        %v523 = vpop.f32.mrf.mxu0
        %v524 = vadd.f32 0.0, %v523
        %v525 = vpop.f32.mrf.mxu0
        %v526 = vadd.f32 0.0, %v525
        %527 = vdwg.mxu0
        %v528 = vrot.slane %v449, 1
        %v529 = vrot.slane %v451, 1
        %v530 = vrot.slane %v454, 1
        %v531 = vrot.slane %v456, 1
        %v532 = vrot.slane %v459, 1
        %v533 = vrot.slane %v461, 1
        %v534 = vrot.slane %v464, 1
        %v535 = vrot.slane %v466, 1
        %v536 = vrot.slane %v469, 1
        %v537 = vrot.slane %v471, 1
        %v538 = vrot.slane %v474, 1
        %v539 = vrot.slane %v476, 1
        %v540 = vrot.slane %v479, 1
        %v541 = vrot.slane %v481, 1
        %v542 = vrot.slane %v484, 1
        %v543 = vrot.slane %v486, 1
        %v544 = vrot.slane %v489, 1
        %v545 = vrot.slane %v491, 1
        %v546 = vrot.slane %v494, 1
        %v547 = vrot.slane %v496, 1
        %v548 = vrot.slane %v499, 1
        %v549 = vrot.slane %v501, 1
        %v550 = vrot.slane %v504, 1
        %v551 = vrot.slane %v506, 1
        %v552 = vrot.slane %v509, 1
        %v553 = vrot.slane %v511, 1
        %v554 = vrot.slane %v514, 1
        %v555 = vrot.slane %v516, 1
        %v556 = vrot.slane %v519, 1
        %v557 = vrot.slane %v521, 1
        %v558 = vrot.slane %v524, 1
        %v559 = vrot.slane %v526, 1
        %v560 = vlaneseq
        %v561 = vshrl.u32 %v560, 7
        %vm562 = vcmp.lt.s32.totalorder %v561, 7
        %v563 = vsel %vm562, %v558, %v559
        %v564 = vsel %vm562, %v557, %v558
        %v565 = vsel %vm562, %v556, %v557
        %v566 = vsel %vm562, %v555, %v556
        %v567 = vsel %vm562, %v554, %v555
        %v568 = vsel %vm562, %v553, %v554
        %v569 = vsel %vm562, %v552, %v553
        %v570 = vsel %vm562, %v551, %v552
        %v571 = vsel %vm562, %v550, %v551
        %v572 = vsel %vm562, %v549, %v550
        %v573 = vsel %vm562, %v548, %v549
        %v574 = vsel %vm562, %v547, %v548
        %v575 = vsel %vm562, %v546, %v547
        %v576 = vsel %vm562, %v545, %v546
        %v577 = vsel %vm562, %v544, %v545
        %v578 = vsel %vm562, %v543, %v544
        %v579 = vsel %vm562, %v542, %v543
        %v580 = vsel %vm562, %v541, %v542
        %v581 = vsel %vm562, %v540, %v541
        %v582 = vsel %vm562, %v539, %v540
        %v583 = vsel %vm562, %v538, %v539
        %v584 = vsel %vm562, %v537, %v538
        %v585 = vsel %vm562, %v536, %v537
        %v586 = vsel %vm562, %v535, %v536
        %v587 = vsel %vm562, %v534, %v535
        %v588 = vsel %vm562, %v533, %v534
        %v589 = vsel %vm562, %v532, %v533
        %v590 = vsel %vm562, %v531, %v532
        %v591 = vsel %vm562, %v530, %v531
        %v592 = vsel %vm562, %v529, %v530
        %v593 = vsel %vm562, %v528, %v529
        %v594 = vsel %vm562, %v559, %v528
        %v599 = vunpack.c.l.b16 %v289
        %v600 = vunpack.c.l.b16 %v290
        %v601 = vunpack.c.l.b16 %v291
        %v602 = vunpack.c.l.b16 %v292
        %v603 = vpack.c.b16 %v600, %v599
        %v604 = vpack.c.b16 %v602, %v601
        %607 = vmatpush.bf16.msra.mxu0 0
        %608 = vmatpush.bf16.msra.mxu0 0
        %609 = vmatpush.bf16.msra.mxu0 0
        %610 = vmatpush.bf16.msra.mxu0 0
        %611 = vmatpush.bf16.msra.mxu0 0
        %612 = vmatpush.bf16.msra.mxu0 0
        %613 = vmatpush.bf16.msra.mxu0 %v604
        %614 = vmatpush.bf16.msra.mxu0 %v603
        %615 = vmatmul.bf16.gmra.mxu0 %v392
        %v616 = vpop.f32.mrf.mxu0
        %v617 = vadd.f32 %v593, %v616
        %v618 = vpop.f32.mrf.mxu0
        %v619 = vadd.f32 %v592, %v618
        %620 = vmatmul.bf16.gmra.mxu0 %v395
        %v621 = vpop.f32.mrf.mxu0
        %v622 = vadd.f32 %v591, %v621
        %v623 = vpop.f32.mrf.mxu0
        %v624 = vadd.f32 %v590, %v623
        %625 = vmatmul.bf16.gmra.mxu0 %v398
        %v626 = vpop.f32.mrf.mxu0
        %v627 = vadd.f32 %v589, %v626
        %v628 = vpop.f32.mrf.mxu0
        %v629 = vadd.f32 %v588, %v628
        %630 = vmatmul.bf16.gmra.mxu0 %v401
        %v631 = vpop.f32.mrf.mxu0
        %v632 = vadd.f32 %v587, %v631
        %v633 = vpop.f32.mrf.mxu0
        %v634 = vadd.f32 %v586, %v633
        %635 = vmatmul.bf16.gmra.mxu0 %v404
        %v636 = vpop.f32.mrf.mxu0
        %v637 = vadd.f32 %v585, %v636
        %v638 = vpop.f32.mrf.mxu0
        %v639 = vadd.f32 %v584, %v638
        %640 = vmatmul.bf16.gmra.mxu0 %v407
        %v641 = vpop.f32.mrf.mxu0
        %v642 = vadd.f32 %v583, %v641
        %v643 = vpop.f32.mrf.mxu0
        %v644 = vadd.f32 %v582, %v643
        %645 = vmatmul.bf16.gmra.mxu0 %v410
        %v646 = vpop.f32.mrf.mxu0
        %v647 = vadd.f32 %v581, %v646
        %v648 = vpop.f32.mrf.mxu0
        %v649 = vadd.f32 %v580, %v648
        %650 = vmatmul.bf16.gmra.mxu0 %v413
        %v651 = vpop.f32.mrf.mxu0
        %v652 = vadd.f32 %v579, %v651
        %v653 = vpop.f32.mrf.mxu0
        %v654 = vadd.f32 %v578, %v653
        %655 = vmatmul.bf16.gmra.mxu0 %v416
        %v656 = vpop.f32.mrf.mxu0
        %v657 = vadd.f32 %v577, %v656
        %v658 = vpop.f32.mrf.mxu0
        %v659 = vadd.f32 %v576, %v658
        %660 = vmatmul.bf16.gmra.mxu0 %v419
        %v661 = vpop.f32.mrf.mxu0
        %v662 = vadd.f32 %v575, %v661
        %v663 = vpop.f32.mrf.mxu0
        %v664 = vadd.f32 %v574, %v663
        %665 = vmatmul.bf16.gmra.mxu0 %v422
        %v666 = vpop.f32.mrf.mxu0
        %v667 = vadd.f32 %v573, %v666
        %v668 = vpop.f32.mrf.mxu0
        %v669 = vadd.f32 %v572, %v668
        %670 = vmatmul.bf16.gmra.mxu0 %v425
        %v671 = vpop.f32.mrf.mxu0
        %v672 = vadd.f32 %v571, %v671
        %v673 = vpop.f32.mrf.mxu0
        %v674 = vadd.f32 %v570, %v673
        %675 = vmatmul.bf16.gmra.mxu0 %v428
        %v676 = vpop.f32.mrf.mxu0
        %v677 = vadd.f32 %v569, %v676
        %v678 = vpop.f32.mrf.mxu0
        %v679 = vadd.f32 %v568, %v678
        %680 = vmatmul.bf16.gmra.mxu0 %v431
        %v681 = vpop.f32.mrf.mxu0
        %v682 = vadd.f32 %v567, %v681
        %v683 = vpop.f32.mrf.mxu0
        %v684 = vadd.f32 %v566, %v683
        %685 = vmatmul.bf16.gmra.mxu0 %v434
        %v686 = vpop.f32.mrf.mxu0
        %v687 = vadd.f32 %v565, %v686
        %v688 = vpop.f32.mrf.mxu0
        %v689 = vadd.f32 %v564, %v688
        %690 = vmatmul.bf16.gmra.mxu0 %v437
        %v691 = vpop.f32.mrf.mxu0
        %v692 = vadd.f32 %v563, %v691
        %v693 = vpop.f32.mrf.mxu0
        %v694 = vadd.f32 %v594, %v693
        %695 = vdwg.mxu0
        %s696 = scalar_lea.vmem %s1, 32
        %v697 = vld [vmem:[%s696] sm:$0xf]
        %v698 = vld [vmem:[%s696 + $0x4] sm:$0xf]
        %v699 = vld [vmem:[%s696 + $0x8] sm:$0xf]
        %v700 = vld [vmem:[%s696 + $0xc] sm:$0xf]
        %v705 = vunpack.c.l.b16 %v697
        %v706 = vunpack.c.l.b16 %v698
        %v707 = vunpack.c.l.b16 %v699
        %v708 = vunpack.c.l.b16 %v700
        %v709 = vpack.c.b16 %v706, %v705
        %v710 = vpack.c.b16 %v708, %v707
        %713 = vmatpush.bf16.msra.mxu0 0
        %714 = vmatpush.bf16.msra.mxu0 0
        %715 = vmatpush.bf16.msra.mxu0 0
        %716 = vmatpush.bf16.msra.mxu0 0
        %717 = vmatpush.bf16.msra.mxu0 0
        %718 = vmatpush.bf16.msra.mxu0 0
        %719 = vmatpush.bf16.msra.mxu0 %v710
        %720 = vmatpush.bf16.msra.mxu0 %v709
        %721 = vmatmul.bf16.gmra.mxu0 %v392
        %v722 = vpop.f32.mrf.mxu0
        %v723 = vadd.f32 0.0, %v722
        %v724 = vpop.f32.mrf.mxu0
        %v725 = vadd.f32 0.0, %v724
        %726 = vmatmul.bf16.gmra.mxu0 %v395
        %v727 = vpop.f32.mrf.mxu0
        %v728 = vadd.f32 0.0, %v727
        %v729 = vpop.f32.mrf.mxu0
        %v730 = vadd.f32 0.0, %v729
        %731 = vmatmul.bf16.gmra.mxu0 %v398
        %v732 = vpop.f32.mrf.mxu0
        %v733 = vadd.f32 0.0, %v732
        %v734 = vpop.f32.mrf.mxu0
        %v735 = vadd.f32 0.0, %v734
        %736 = vmatmul.bf16.gmra.mxu0 %v401
        %v737 = vpop.f32.mrf.mxu0
        %v738 = vadd.f32 0.0, %v737
        %v739 = vpop.f32.mrf.mxu0
        %v740 = vadd.f32 0.0, %v739
        %741 = vmatmul.bf16.gmra.mxu0 %v404
        %v742 = vpop.f32.mrf.mxu0
        %v743 = vadd.f32 0.0, %v742
        %v744 = vpop.f32.mrf.mxu0
        %v745 = vadd.f32 0.0, %v744
        %746 = vmatmul.bf16.gmra.mxu0 %v407
        %v747 = vpop.f32.mrf.mxu0
        %v748 = vadd.f32 0.0, %v747
        %v749 = vpop.f32.mrf.mxu0
        %v750 = vadd.f32 0.0, %v749
        %751 = vmatmul.bf16.gmra.mxu0 %v410
        %v752 = vpop.f32.mrf.mxu0
        %v753 = vadd.f32 0.0, %v752
        %v754 = vpop.f32.mrf.mxu0
        %v755 = vadd.f32 0.0, %v754
        %756 = vmatmul.bf16.gmra.mxu0 %v413
        %v757 = vpop.f32.mrf.mxu0
        %v758 = vadd.f32 0.0, %v757
        %v759 = vpop.f32.mrf.mxu0
        %v760 = vadd.f32 0.0, %v759
        %761 = vmatmul.bf16.gmra.mxu0 %v416
        %v762 = vpop.f32.mrf.mxu0
        %v763 = vadd.f32 0.0, %v762
        %v764 = vpop.f32.mrf.mxu0
        %v765 = vadd.f32 0.0, %v764
        %766 = vmatmul.bf16.gmra.mxu0 %v419
        %v767 = vpop.f32.mrf.mxu0
        %v768 = vadd.f32 0.0, %v767
        %v769 = vpop.f32.mrf.mxu0
        %v770 = vadd.f32 0.0, %v769
        %771 = vmatmul.bf16.gmra.mxu0 %v422
        %v772 = vpop.f32.mrf.mxu0
        %v773 = vadd.f32 0.0, %v772
        %v774 = vpop.f32.mrf.mxu0
        %v775 = vadd.f32 0.0, %v774
        %776 = vmatmul.bf16.gmra.mxu0 %v425
        %v777 = vpop.f32.mrf.mxu0
        %v778 = vadd.f32 0.0, %v777
        %v779 = vpop.f32.mrf.mxu0
        %v780 = vadd.f32 0.0, %v779
        %781 = vmatmul.bf16.gmra.mxu0 %v428
        %v782 = vpop.f32.mrf.mxu0
        %v783 = vadd.f32 0.0, %v782
        %v784 = vpop.f32.mrf.mxu0
        %v785 = vadd.f32 0.0, %v784
        %786 = vmatmul.bf16.gmra.mxu0 %v431
        %v787 = vpop.f32.mrf.mxu0
        %v788 = vadd.f32 0.0, %v787
        %v789 = vpop.f32.mrf.mxu0
        %v790 = vadd.f32 0.0, %v789
        %791 = vmatmul.bf16.gmra.mxu0 %v434
        %v792 = vpop.f32.mrf.mxu0
        %v793 = vadd.f32 0.0, %v792
        %v794 = vpop.f32.mrf.mxu0
        %v795 = vadd.f32 0.0, %v794
        %796 = vmatmul.bf16.gmra.mxu0 %v437
        %v797 = vpop.f32.mrf.mxu0
        %v798 = vadd.f32 0.0, %v797
        %v799 = vpop.f32.mrf.mxu0
        %v800 = vadd.f32 0.0, %v799
        %801 = vdwg.mxu0
        %v802 = vrot.slane %v723, 2
        %v803 = vrot.slane %v725, 2
        %v804 = vrot.slane %v728, 2
        %v805 = vrot.slane %v730, 2
        %v806 = vrot.slane %v733, 2
        %v807 = vrot.slane %v735, 2
        %v808 = vrot.slane %v738, 2
        %v809 = vrot.slane %v740, 2
        %v810 = vrot.slane %v743, 2
        %v811 = vrot.slane %v745, 2
        %v812 = vrot.slane %v748, 2
        %v813 = vrot.slane %v750, 2
        %v814 = vrot.slane %v753, 2
        %v815 = vrot.slane %v755, 2
        %v816 = vrot.slane %v758, 2
        %v817 = vrot.slane %v760, 2
        %v818 = vrot.slane %v763, 2
        %v819 = vrot.slane %v765, 2
        %v820 = vrot.slane %v768, 2
        %v821 = vrot.slane %v770, 2
        %v822 = vrot.slane %v773, 2
        %v823 = vrot.slane %v775, 2
        %v824 = vrot.slane %v778, 2
        %v825 = vrot.slane %v780, 2
        %v826 = vrot.slane %v783, 2
        %v827 = vrot.slane %v785, 2
        %v828 = vrot.slane %v788, 2
        %v829 = vrot.slane %v790, 2
        %v830 = vrot.slane %v793, 2
        %v831 = vrot.slane %v795, 2
        %v832 = vrot.slane %v798, 2
        %v833 = vrot.slane %v800, 2
        %vm834 = vcmp.lt.s32.totalorder %v561, 6
        %v835 = vsel %vm834, %v832, %v833
        %v836 = vsel %vm834, %v831, %v832
        %v837 = vsel %vm834, %v830, %v831
        %v838 = vsel %vm834, %v829, %v830
        %v839 = vsel %vm834, %v828, %v829
        %v840 = vsel %vm834, %v827, %v828
        %v841 = vsel %vm834, %v826, %v827
        %v842 = vsel %vm834, %v825, %v826
        %v843 = vsel %vm834, %v824, %v825
        %v844 = vsel %vm834, %v823, %v824
        %v845 = vsel %vm834, %v822, %v823
        %v846 = vsel %vm834, %v821, %v822
        %v847 = vsel %vm834, %v820, %v821
        %v848 = vsel %vm834, %v819, %v820
        %v849 = vsel %vm834, %v818, %v819
        %v850 = vsel %vm834, %v817, %v818
        %v851 = vsel %vm834, %v816, %v817
        %v852 = vsel %vm834, %v815, %v816
        %v853 = vsel %vm834, %v814, %v815
        %v854 = vsel %vm834, %v813, %v814
        %v855 = vsel %vm834, %v812, %v813
        %v856 = vsel %vm834, %v811, %v812
        %v857 = vsel %vm834, %v810, %v811
        %v858 = vsel %vm834, %v809, %v810
        %v859 = vsel %vm834, %v808, %v809
        %v860 = vsel %vm834, %v807, %v808
        %v861 = vsel %vm834, %v806, %v807
        %v862 = vsel %vm834, %v805, %v806
        %v863 = vsel %vm834, %v804, %v805
        %v864 = vsel %vm834, %v803, %v804
        %v865 = vsel %vm834, %v802, %v803
        %v866 = vsel %vm834, %v833, %v802
        %v867 = vadd.f32 %v617, %v865
        %v868 = vadd.f32 %v619, %v864
        %v869 = vadd.f32 %v622, %v863
        %v870 = vadd.f32 %v624, %v862
        %v871 = vadd.f32 %v627, %v861
        %v872 = vadd.f32 %v629, %v860
        %v873 = vadd.f32 %v632, %v859
        %v874 = vadd.f32 %v634, %v858
        %v875 = vadd.f32 %v637, %v857
        %v876 = vadd.f32 %v639, %v856
        %v877 = vadd.f32 %v642, %v855
        %v878 = vadd.f32 %v644, %v854
        %v879 = vadd.f32 %v647, %v853
        %v880 = vadd.f32 %v649, %v852
        %v881 = vadd.f32 %v652, %v851
        %v882 = vadd.f32 %v654, %v850
        %v883 = vadd.f32 %v657, %v849
        %v884 = vadd.f32 %v659, %v848
        %v885 = vadd.f32 %v662, %v847
        %v886 = vadd.f32 %v664, %v846
        %v887 = vadd.f32 %v667, %v845
        %v888 = vadd.f32 %v669, %v844
        %v889 = vadd.f32 %v672, %v843
        %v890 = vadd.f32 %v674, %v842
        %v891 = vadd.f32 %v677, %v841
        %v892 = vadd.f32 %v679, %v840
        %v893 = vadd.f32 %v682, %v839
        %v894 = vadd.f32 %v684, %v838
        %v895 = vadd.f32 %v687, %v837
        %v896 = vadd.f32 %v689, %v836
        %v897 = vadd.f32 %v692, %v835
        %v898 = vadd.f32 %v694, %v866
        %s899 = scalar_lea.vmem %s1, 48
        %v900 = vld [vmem:[%s899] sm:$0xf]
        %v901 = vld [vmem:[%s899 + $0x4] sm:$0xf]
        %v902 = vld [vmem:[%s899 + $0x8] sm:$0xf]
        %v903 = vld [vmem:[%s899 + $0xc] sm:$0xf]
        %v908 = vunpack.c.l.b16 %v900
        %v909 = vunpack.c.l.b16 %v901
        %v910 = vunpack.c.l.b16 %v902
        %v911 = vunpack.c.l.b16 %v903
        %v912 = vpack.c.b16 %v909, %v908
        %v913 = vpack.c.b16 %v911, %v910
        %916 = vmatpush.bf16.msra.mxu0 0
        %917 = vmatpush.bf16.msra.mxu0 0
        %918 = vmatpush.bf16.msra.mxu0 0
        %919 = vmatpush.bf16.msra.mxu0 0
        %920 = vmatpush.bf16.msra.mxu0 0
        %921 = vmatpush.bf16.msra.mxu0 0
        %922 = vmatpush.bf16.msra.mxu0 %v913
        %923 = vmatpush.bf16.msra.mxu0 %v912
        %924 = vmatmul.bf16.gmra.mxu0 %v392
        %v925 = vpop.f32.mrf.mxu0
        %v926 = vadd.f32 0.0, %v925
        %v927 = vpop.f32.mrf.mxu0
        %v928 = vadd.f32 0.0, %v927
        %929 = vmatmul.bf16.gmra.mxu0 %v395
        %v930 = vpop.f32.mrf.mxu0
        %v931 = vadd.f32 0.0, %v930
        %v932 = vpop.f32.mrf.mxu0
        %v933 = vadd.f32 0.0, %v932
        %934 = vmatmul.bf16.gmra.mxu0 %v398
        %v935 = vpop.f32.mrf.mxu0
        %v936 = vadd.f32 0.0, %v935
        %v937 = vpop.f32.mrf.mxu0
        %v938 = vadd.f32 0.0, %v937
        %939 = vmatmul.bf16.gmra.mxu0 %v401
        %v940 = vpop.f32.mrf.mxu0
        %v941 = vadd.f32 0.0, %v940
        %v942 = vpop.f32.mrf.mxu0
        %v943 = vadd.f32 0.0, %v942
        %944 = vmatmul.bf16.gmra.mxu0 %v404
        %v945 = vpop.f32.mrf.mxu0
        %v946 = vadd.f32 0.0, %v945
        %v947 = vpop.f32.mrf.mxu0
        %v948 = vadd.f32 0.0, %v947
        %949 = vmatmul.bf16.gmra.mxu0 %v407
        %v950 = vpop.f32.mrf.mxu0
        %v951 = vadd.f32 0.0, %v950
        %v952 = vpop.f32.mrf.mxu0
        %v953 = vadd.f32 0.0, %v952
        %954 = vmatmul.bf16.gmra.mxu0 %v410
        %v955 = vpop.f32.mrf.mxu0
        %v956 = vadd.f32 0.0, %v955
        %v957 = vpop.f32.mrf.mxu0
        %v958 = vadd.f32 0.0, %v957
        %959 = vmatmul.bf16.gmra.mxu0 %v413
        %v960 = vpop.f32.mrf.mxu0
        %v961 = vadd.f32 0.0, %v960
        %v962 = vpop.f32.mrf.mxu0
        %v963 = vadd.f32 0.0, %v962
        %964 = vmatmul.bf16.gmra.mxu0 %v416
        %v965 = vpop.f32.mrf.mxu0
        %v966 = vadd.f32 0.0, %v965
        %v967 = vpop.f32.mrf.mxu0
        %v968 = vadd.f32 0.0, %v967
        %969 = vmatmul.bf16.gmra.mxu0 %v419
        %v970 = vpop.f32.mrf.mxu0
        %v971 = vadd.f32 0.0, %v970
        %v972 = vpop.f32.mrf.mxu0
        %v973 = vadd.f32 0.0, %v972
        %974 = vmatmul.bf16.gmra.mxu0 %v422
        %v975 = vpop.f32.mrf.mxu0
        %v976 = vadd.f32 0.0, %v975
        %v977 = vpop.f32.mrf.mxu0
        %v978 = vadd.f32 0.0, %v977
        %979 = vmatmul.bf16.gmra.mxu0 %v425
        %v980 = vpop.f32.mrf.mxu0
        %v981 = vadd.f32 0.0, %v980
        %v982 = vpop.f32.mrf.mxu0
        %v983 = vadd.f32 0.0, %v982
        %984 = vmatmul.bf16.gmra.mxu0 %v428
        %v985 = vpop.f32.mrf.mxu0
        %v986 = vadd.f32 0.0, %v985
        %v987 = vpop.f32.mrf.mxu0
        %v988 = vadd.f32 0.0, %v987
        %989 = vmatmul.bf16.gmra.mxu0 %v431
        %v990 = vpop.f32.mrf.mxu0
        %v991 = vadd.f32 0.0, %v990
        %v992 = vpop.f32.mrf.mxu0
        %v993 = vadd.f32 0.0, %v992
        %994 = vmatmul.bf16.gmra.mxu0 %v434
        %v995 = vpop.f32.mrf.mxu0
        %v996 = vadd.f32 0.0, %v995
        %v997 = vpop.f32.mrf.mxu0
        %v998 = vadd.f32 0.0, %v997
        %999 = vmatmul.bf16.gmra.mxu0 %v437
        %v1000 = vpop.f32.mrf.mxu0
        %v1001 = vadd.f32 0.0, %v1000
        %v1002 = vpop.f32.mrf.mxu0
        %v1003 = vadd.f32 0.0, %v1002
        %1004 = vdwg.mxu0
        %v1005 = vrot.slane %v926, 3
        %v1006 = vrot.slane %v928, 3
        %v1007 = vrot.slane %v931, 3
        %v1008 = vrot.slane %v933, 3
        %v1009 = vrot.slane %v936, 3
        %v1010 = vrot.slane %v938, 3
        %v1011 = vrot.slane %v941, 3
        %v1012 = vrot.slane %v943, 3
        %v1013 = vrot.slane %v946, 3
        %v1014 = vrot.slane %v948, 3
        %v1015 = vrot.slane %v951, 3
        %v1016 = vrot.slane %v953, 3
        %v1017 = vrot.slane %v956, 3
        %v1018 = vrot.slane %v958, 3
        %v1019 = vrot.slane %v961, 3
        %v1020 = vrot.slane %v963, 3
        %v1021 = vrot.slane %v966, 3
        %v1022 = vrot.slane %v968, 3
        %v1023 = vrot.slane %v971, 3
        %v1024 = vrot.slane %v973, 3
        %v1025 = vrot.slane %v976, 3
        %v1026 = vrot.slane %v978, 3
        %v1027 = vrot.slane %v981, 3
        %v1028 = vrot.slane %v983, 3
        %v1029 = vrot.slane %v986, 3
        %v1030 = vrot.slane %v988, 3
        %v1031 = vrot.slane %v991, 3
        %v1032 = vrot.slane %v993, 3
        %v1033 = vrot.slane %v996, 3
        %v1034 = vrot.slane %v998, 3
        %v1035 = vrot.slane %v1001, 3
        %v1036 = vrot.slane %v1003, 3
        %vm1037 = vcmp.lt.s32.totalorder %v561, 5
        %v1038 = vsel %vm1037, %v1035, %v1036
        %v1039 = vsel %vm1037, %v1034, %v1035
        %v1040 = vsel %vm1037, %v1033, %v1034
        %v1041 = vsel %vm1037, %v1032, %v1033
        %v1042 = vsel %vm1037, %v1031, %v1032
        %v1043 = vsel %vm1037, %v1030, %v1031
        %v1044 = vsel %vm1037, %v1029, %v1030
        %v1045 = vsel %vm1037, %v1028, %v1029
        %v1046 = vsel %vm1037, %v1027, %v1028
        %v1047 = vsel %vm1037, %v1026, %v1027
        %v1048 = vsel %vm1037, %v1025, %v1026
        %v1049 = vsel %vm1037, %v1024, %v1025
        %v1050 = vsel %vm1037, %v1023, %v1024
        %v1051 = vsel %vm1037, %v1022, %v1023
        %v1052 = vsel %vm1037, %v1021, %v1022
        %v1053 = vsel %vm1037, %v1020, %v1021
        %v1054 = vsel %vm1037, %v1019, %v1020
        %v1055 = vsel %vm1037, %v1018, %v1019
        %v1056 = vsel %vm1037, %v1017, %v1018
        %v1057 = vsel %vm1037, %v1016, %v1017
        %v1058 = vsel %vm1037, %v1015, %v1016
        %v1059 = vsel %vm1037, %v1014, %v1015
        %v1060 = vsel %vm1037, %v1013, %v1014
        %v1061 = vsel %vm1037, %v1012, %v1013
        %v1062 = vsel %vm1037, %v1011, %v1012
        %v1063 = vsel %vm1037, %v1010, %v1011
        %v1064 = vsel %vm1037, %v1009, %v1010
        %v1065 = vsel %vm1037, %v1008, %v1009
        %v1066 = vsel %vm1037, %v1007, %v1008
        %v1067 = vsel %vm1037, %v1006, %v1007
        %v1068 = vsel %vm1037, %v1005, %v1006
        %v1069 = vsel %vm1037, %v1036, %v1005
        %v1070 = vadd.f32 %v867, %v1068
        %v1071 = vadd.f32 %v868, %v1067
        %v1072 = vadd.f32 %v869, %v1066
        %v1073 = vadd.f32 %v870, %v1065
        %v1074 = vadd.f32 %v871, %v1064
        %v1075 = vadd.f32 %v872, %v1063
        %v1076 = vadd.f32 %v873, %v1062
        %v1077 = vadd.f32 %v874, %v1061
        %v1078 = vadd.f32 %v875, %v1060
        %v1079 = vadd.f32 %v876, %v1059
        %v1080 = vadd.f32 %v877, %v1058
        %v1081 = vadd.f32 %v878, %v1057
        %v1082 = vadd.f32 %v879, %v1056
        %v1083 = vadd.f32 %v880, %v1055
        %v1084 = vadd.f32 %v881, %v1054
        %v1085 = vadd.f32 %v882, %v1053
        %v1086 = vadd.f32 %v883, %v1052
        %v1087 = vadd.f32 %v884, %v1051
        %v1088 = vadd.f32 %v885, %v1050
        %v1089 = vadd.f32 %v886, %v1049
        %v1090 = vadd.f32 %v887, %v1048
        %v1091 = vadd.f32 %v888, %v1047
        %v1092 = vadd.f32 %v889, %v1046
        %v1093 = vadd.f32 %v890, %v1045
        %v1094 = vadd.f32 %v891, %v1044
        %v1095 = vadd.f32 %v892, %v1043
        %v1096 = vadd.f32 %v893, %v1042
        %v1097 = vadd.f32 %v894, %v1041
        %v1098 = vadd.f32 %v895, %v1040
        %v1099 = vadd.f32 %v896, %v1039
        %v1100 = vadd.f32 %v897, %v1038
        %v1101 = vadd.f32 %v898, %v1069
        %s1102 = scalar_lea.vmem %s1, 64
        %v1103 = vld [vmem:[%s1102] sm:$0xf]
        %v1104 = vld [vmem:[%s1102 + $0x4] sm:$0xf]
        %v1105 = vld [vmem:[%s1102 + $0x8] sm:$0xf]
        %v1106 = vld [vmem:[%s1102 + $0xc] sm:$0xf]
        %v1111 = vunpack.c.l.b16 %v1103
        %v1112 = vunpack.c.l.b16 %v1104
        %v1113 = vunpack.c.l.b16 %v1105
        %v1114 = vunpack.c.l.b16 %v1106
        %v1115 = vpack.c.b16 %v1112, %v1111
        %v1116 = vpack.c.b16 %v1114, %v1113
        %1119 = vmatpush.bf16.msra.mxu0 0
        %1120 = vmatpush.bf16.msra.mxu0 0
        %1121 = vmatpush.bf16.msra.mxu0 0
        %1122 = vmatpush.bf16.msra.mxu0 0
        %1123 = vmatpush.bf16.msra.mxu0 0
        %1124 = vmatpush.bf16.msra.mxu0 0
        %1125 = vmatpush.bf16.msra.mxu0 %v1116
        %1126 = vmatpush.bf16.msra.mxu0 %v1115
        %1127 = vmatmul.bf16.gmra.mxu0 %v392
        %v1128 = vpop.f32.mrf.mxu0
        %v1129 = vadd.f32 0.0, %v1128
        %v1130 = vpop.f32.mrf.mxu0
        %v1131 = vadd.f32 0.0, %v1130
        %1132 = vmatmul.bf16.gmra.mxu0 %v395
        %v1133 = vpop.f32.mrf.mxu0
        %v1134 = vadd.f32 0.0, %v1133
        %v1135 = vpop.f32.mrf.mxu0
        %v1136 = vadd.f32 0.0, %v1135
        %1137 = vmatmul.bf16.gmra.mxu0 %v398
        %v1138 = vpop.f32.mrf.mxu0
        %v1139 = vadd.f32 0.0, %v1138
        %v1140 = vpop.f32.mrf.mxu0
        %v1141 = vadd.f32 0.0, %v1140
        %1142 = vmatmul.bf16.gmra.mxu0 %v401
        %v1143 = vpop.f32.mrf.mxu0
        %v1144 = vadd.f32 0.0, %v1143
        %v1145 = vpop.f32.mrf.mxu0
        %v1146 = vadd.f32 0.0, %v1145
        %1147 = vmatmul.bf16.gmra.mxu0 %v404
        %v1148 = vpop.f32.mrf.mxu0
        %v1149 = vadd.f32 0.0, %v1148
        %v1150 = vpop.f32.mrf.mxu0
        %v1151 = vadd.f32 0.0, %v1150
        %1152 = vmatmul.bf16.gmra.mxu0 %v407
        %v1153 = vpop.f32.mrf.mxu0
        %v1154 = vadd.f32 0.0, %v1153
        %v1155 = vpop.f32.mrf.mxu0
        %v1156 = vadd.f32 0.0, %v1155
        %1157 = vmatmul.bf16.gmra.mxu0 %v410
        %v1158 = vpop.f32.mrf.mxu0
        %v1159 = vadd.f32 0.0, %v1158
        %v1160 = vpop.f32.mrf.mxu0
        %v1161 = vadd.f32 0.0, %v1160
        %1162 = vmatmul.bf16.gmra.mxu0 %v413
        %v1163 = vpop.f32.mrf.mxu0
        %v1164 = vadd.f32 0.0, %v1163
        %v1165 = vpop.f32.mrf.mxu0
        %v1166 = vadd.f32 0.0, %v1165
        %1167 = vmatmul.bf16.gmra.mxu0 %v416
        %v1168 = vpop.f32.mrf.mxu0
        %v1169 = vadd.f32 0.0, %v1168
        %v1170 = vpop.f32.mrf.mxu0
        %v1171 = vadd.f32 0.0, %v1170
        %1172 = vmatmul.bf16.gmra.mxu0 %v419
        %v1173 = vpop.f32.mrf.mxu0
        %v1174 = vadd.f32 0.0, %v1173
        %v1175 = vpop.f32.mrf.mxu0
        %v1176 = vadd.f32 0.0, %v1175
        %1177 = vmatmul.bf16.gmra.mxu0 %v422
        %v1178 = vpop.f32.mrf.mxu0
        %v1179 = vadd.f32 0.0, %v1178
        %v1180 = vpop.f32.mrf.mxu0
        %v1181 = vadd.f32 0.0, %v1180
        %1182 = vmatmul.bf16.gmra.mxu0 %v425
        %v1183 = vpop.f32.mrf.mxu0
        %v1184 = vadd.f32 0.0, %v1183
        %v1185 = vpop.f32.mrf.mxu0
        %v1186 = vadd.f32 0.0, %v1185
        %1187 = vmatmul.bf16.gmra.mxu0 %v428
        %v1188 = vpop.f32.mrf.mxu0
        %v1189 = vadd.f32 0.0, %v1188
        %v1190 = vpop.f32.mrf.mxu0
        %v1191 = vadd.f32 0.0, %v1190
        %1192 = vmatmul.bf16.gmra.mxu0 %v431
        %v1193 = vpop.f32.mrf.mxu0
        %v1194 = vadd.f32 0.0, %v1193
        %v1195 = vpop.f32.mrf.mxu0
        %v1196 = vadd.f32 0.0, %v1195
        %1197 = vmatmul.bf16.gmra.mxu0 %v434
        %v1198 = vpop.f32.mrf.mxu0
        %v1199 = vadd.f32 0.0, %v1198
        %v1200 = vpop.f32.mrf.mxu0
        %v1201 = vadd.f32 0.0, %v1200
        %1202 = vmatmul.bf16.gmra.mxu0 %v437
        %v1203 = vpop.f32.mrf.mxu0
        %v1204 = vadd.f32 0.0, %v1203
        %v1205 = vpop.f32.mrf.mxu0
        %v1206 = vadd.f32 0.0, %v1205
        %1207 = vdwg.mxu0
        %v1208 = vrot.slane %v1129, 4
        %v1209 = vrot.slane %v1131, 4
        %v1210 = vrot.slane %v1134, 4
        %v1211 = vrot.slane %v1136, 4
        %v1212 = vrot.slane %v1139, 4
        %v1213 = vrot.slane %v1141, 4
        %v1214 = vrot.slane %v1144, 4
        %v1215 = vrot.slane %v1146, 4
        %v1216 = vrot.slane %v1149, 4
        %v1217 = vrot.slane %v1151, 4
        %v1218 = vrot.slane %v1154, 4
        %v1219 = vrot.slane %v1156, 4
        %v1220 = vrot.slane %v1159, 4
        %v1221 = vrot.slane %v1161, 4
        %v1222 = vrot.slane %v1164, 4
        %v1223 = vrot.slane %v1166, 4
        %v1224 = vrot.slane %v1169, 4
        %v1225 = vrot.slane %v1171, 4
        %v1226 = vrot.slane %v1174, 4
        %v1227 = vrot.slane %v1176, 4
        %v1228 = vrot.slane %v1179, 4
        %v1229 = vrot.slane %v1181, 4
        %v1230 = vrot.slane %v1184, 4
        %v1231 = vrot.slane %v1186, 4
        %v1232 = vrot.slane %v1189, 4
        %v1233 = vrot.slane %v1191, 4
        %v1234 = vrot.slane %v1194, 4
        %v1235 = vrot.slane %v1196, 4
        %v1236 = vrot.slane %v1199, 4
        %v1237 = vrot.slane %v1201, 4
        %v1238 = vrot.slane %v1204, 4
        %v1239 = vrot.slane %v1206, 4
        %vm1240 = vcmp.lt.s32.totalorder %v561, 4
        %v1241 = vsel %vm1240, %v1238, %v1239
        %v1242 = vsel %vm1240, %v1237, %v1238
        %v1243 = vsel %vm1240, %v1236, %v1237
        %v1244 = vsel %vm1240, %v1235, %v1236
        %v1245 = vsel %vm1240, %v1234, %v1235
        %v1246 = vsel %vm1240, %v1233, %v1234
        %v1247 = vsel %vm1240, %v1232, %v1233
        %v1248 = vsel %vm1240, %v1231, %v1232
        %v1249 = vsel %vm1240, %v1230, %v1231
        %v1250 = vsel %vm1240, %v1229, %v1230
        %v1251 = vsel %vm1240, %v1228, %v1229
        %v1252 = vsel %vm1240, %v1227, %v1228
        %v1253 = vsel %vm1240, %v1226, %v1227
        %v1254 = vsel %vm1240, %v1225, %v1226
        %v1255 = vsel %vm1240, %v1224, %v1225
        %v1256 = vsel %vm1240, %v1223, %v1224
        %v1257 = vsel %vm1240, %v1222, %v1223
        %v1258 = vsel %vm1240, %v1221, %v1222
        %v1259 = vsel %vm1240, %v1220, %v1221
        %v1260 = vsel %vm1240, %v1219, %v1220
        %v1261 = vsel %vm1240, %v1218, %v1219
        %v1262 = vsel %vm1240, %v1217, %v1218
        %v1263 = vsel %vm1240, %v1216, %v1217
        %v1264 = vsel %vm1240, %v1215, %v1216
        %v1265 = vsel %vm1240, %v1214, %v1215
        %v1266 = vsel %vm1240, %v1213, %v1214
        %v1267 = vsel %vm1240, %v1212, %v1213
        %v1268 = vsel %vm1240, %v1211, %v1212
        %v1269 = vsel %vm1240, %v1210, %v1211
        %v1270 = vsel %vm1240, %v1209, %v1210
        %v1271 = vsel %vm1240, %v1208, %v1209
        %v1272 = vsel %vm1240, %v1239, %v1208
        %v1273 = vadd.f32 %v1070, %v1271
        %v1274 = vadd.f32 %v1071, %v1270
        %v1275 = vadd.f32 %v1072, %v1269
        %v1276 = vadd.f32 %v1073, %v1268
        %v1277 = vadd.f32 %v1074, %v1267
        %v1278 = vadd.f32 %v1075, %v1266
        %v1279 = vadd.f32 %v1076, %v1265
        %v1280 = vadd.f32 %v1077, %v1264
        %v1281 = vadd.f32 %v1078, %v1263
        %v1282 = vadd.f32 %v1079, %v1262
        %v1283 = vadd.f32 %v1080, %v1261
        %v1284 = vadd.f32 %v1081, %v1260
        %v1285 = vadd.f32 %v1082, %v1259
        %v1286 = vadd.f32 %v1083, %v1258
        %v1287 = vadd.f32 %v1084, %v1257
        %v1288 = vadd.f32 %v1085, %v1256
        %v1289 = vadd.f32 %v1086, %v1255
        %v1290 = vadd.f32 %v1087, %v1254
        %v1291 = vadd.f32 %v1088, %v1253
        %v1292 = vadd.f32 %v1089, %v1252
        %v1293 = vadd.f32 %v1090, %v1251
        %v1294 = vadd.f32 %v1091, %v1250
        %v1295 = vadd.f32 %v1092, %v1249
        %v1296 = vadd.f32 %v1093, %v1248
        %v1297 = vadd.f32 %v1094, %v1247
        %v1298 = vadd.f32 %v1095, %v1246
        %v1299 = vadd.f32 %v1096, %v1245
        %v1300 = vadd.f32 %v1097, %v1244
        %v1301 = vadd.f32 %v1098, %v1243
        %v1302 = vadd.f32 %v1099, %v1242
        %v1303 = vadd.f32 %v1100, %v1241
        %v1304 = vadd.f32 %v1101, %v1272
        %v1305 = vld [vmem:[%s2] sm:$0x1]
        %v1307 = vperm.slane %v1305, 0
        %v1309 = vadd.f32 %v1273, %v1307
        %v1310 = vadd.f32 %v1274, %v1307
        %v1311 = vadd.f32 %v1275, %v1307
        %v1312 = vadd.f32 %v1276, %v1307
        %v1313 = vadd.f32 %v1277, %v1307
        %v1314 = vadd.f32 %v1278, %v1307
        %v1315 = vadd.f32 %v1279, %v1307
        %v1316 = vadd.f32 %v1280, %v1307
        %v1317 = vadd.f32 %v1281, %v1307
        %v1318 = vadd.f32 %v1282, %v1307
        %v1319 = vadd.f32 %v1283, %v1307
        %v1320 = vadd.f32 %v1284, %v1307
        %v1321 = vadd.f32 %v1285, %v1307
        %v1322 = vadd.f32 %v1286, %v1307
        %v1323 = vadd.f32 %v1287, %v1307
        %v1324 = vadd.f32 %v1288, %v1307
        %v1325 = vadd.f32 %v1289, %v1307
        %v1326 = vadd.f32 %v1290, %v1307
        %v1327 = vadd.f32 %v1291, %v1307
        %v1328 = vadd.f32 %v1292, %v1307
        %v1329 = vadd.f32 %v1293, %v1307
        %v1330 = vadd.f32 %v1294, %v1307
        %v1331 = vadd.f32 %v1295, %v1307
        %v1332 = vadd.f32 %v1296, %v1307
        %v1333 = vadd.f32 %v1297, %v1307
        %v1334 = vadd.f32 %v1298, %v1307
        %v1335 = vadd.f32 %v1299, %v1307
        %v1336 = vadd.f32 %v1300, %v1307
        %v1337 = vadd.f32 %v1301, %v1307
        %v1338 = vadd.f32 %v1302, %v1307
        %v1339 = vadd.f32 %v1303, %v1307
        %v1340 = vadd.f32 %v1304, %v1307
        %v1341 = vmax.f32 %v1309, 0.0
        %v1342 = vmax.f32 %v1310, 0.0
        %v1343 = vmax.f32 %v1311, 0.0
        %v1344 = vmax.f32 %v1312, 0.0
        %v1345 = vmax.f32 %v1313, 0.0
        %v1346 = vmax.f32 %v1314, 0.0
        %v1347 = vmax.f32 %v1315, 0.0
        %v1348 = vmax.f32 %v1316, 0.0
        %v1349 = vmax.f32 %v1317, 0.0
        %v1350 = vmax.f32 %v1318, 0.0
        %v1351 = vmax.f32 %v1319, 0.0
        %v1352 = vmax.f32 %v1320, 0.0
        %v1353 = vmax.f32 %v1321, 0.0
        %v1354 = vmax.f32 %v1322, 0.0
        %v1355 = vmax.f32 %v1323, 0.0
        %v1356 = vmax.f32 %v1324, 0.0
        %v1357 = vmax.f32 %v1325, 0.0
        %v1358 = vmax.f32 %v1326, 0.0
        %v1359 = vmax.f32 %v1327, 0.0
        %v1360 = vmax.f32 %v1328, 0.0
        %v1361 = vmax.f32 %v1329, 0.0
        %v1362 = vmax.f32 %v1330, 0.0
        %v1363 = vmax.f32 %v1331, 0.0
        %v1364 = vmax.f32 %v1332, 0.0
        %v1365 = vmax.f32 %v1333, 0.0
        %v1366 = vmax.f32 %v1334, 0.0
        %v1367 = vmax.f32 %v1335, 0.0
        %v1368 = vmax.f32 %v1336, 0.0
        %v1369 = vmax.f32 %v1337, 0.0
        %v1370 = vmax.f32 %v1338, 0.0
        %v1371 = vmax.f32 %v1339, 0.0
        %v1372 = vmax.f32 %v1340, 0.0
        %v1373 = vld [vmem:[%s3] sm:$0xff]
        %v1374 = vld [vmem:[%s3 + $0x8] sm:$0xff]
        %vm1375 = vcmp.gt.f32.partialorder %v1373, 0.5
        %vm1376 = vcmp.gt.f32.partialorder %v1374, 0.5
        %v1377 = vsel %vm1375, 1, 0
        %v1378 = vsel %vm1376, 1, 0
        %vm1379 = vcmp.eq.s32.totalorder %v1377, 1
        %vm1380 = vcmp.eq.s32.totalorder %v1378, 1
        %v1381 = vsel %vm1379, %v1341, -1e+30
        %v1382 = vsel %vm1380, %v1342, -1e+30
        %v1383 = vsel %vm1379, %v1343, -1e+30
        %v1384 = vsel %vm1380, %v1344, -1e+30
        %v1385 = vsel %vm1379, %v1345, -1e+30
        %v1386 = vsel %vm1380, %v1346, -1e+30
        %v1387 = vsel %vm1379, %v1347, -1e+30
        %v1388 = vsel %vm1380, %v1348, -1e+30
        %v1389 = vsel %vm1379, %v1349, -1e+30
        %v1390 = vsel %vm1380, %v1350, -1e+30
        %v1391 = vsel %vm1379, %v1351, -1e+30
        %v1392 = vsel %vm1380, %v1352, -1e+30
        %v1393 = vsel %vm1379, %v1353, -1e+30
        %v1394 = vsel %vm1380, %v1354, -1e+30
        %v1395 = vsel %vm1379, %v1355, -1e+30
        %v1396 = vsel %vm1380, %v1356, -1e+30
        %v1397 = vsel %vm1379, %v1357, -1e+30
        %v1398 = vsel %vm1380, %v1358, -1e+30
        %v1399 = vsel %vm1379, %v1359, -1e+30
        %v1400 = vsel %vm1380, %v1360, -1e+30
        %v1401 = vsel %vm1379, %v1361, -1e+30
        %v1402 = vsel %vm1380, %v1362, -1e+30
        %v1403 = vsel %vm1379, %v1363, -1e+30
        %v1404 = vsel %vm1380, %v1364, -1e+30
        %v1405 = vsel %vm1379, %v1365, -1e+30
        %v1406 = vsel %vm1380, %v1366, -1e+30
        %v1407 = vsel %vm1379, %v1367, -1e+30
        %v1408 = vsel %vm1380, %v1368, -1e+30
        %v1409 = vsel %vm1379, %v1369, -1e+30
        %v1410 = vsel %vm1380, %v1370, -1e+30
        %v1411 = vsel %vm1379, %v1371, -1e+30
        %v1412 = vsel %vm1380, %v1372, -1e+30
        %v1413 = vmax.f32 %v1381, %v1382
        %v1414 = vrot.slane %v1413, 4
        %v1415 = vmax.f32 %v1413, %v1414
        %v1416 = vrot.slane %v1415, 2
        %v1417 = vmax.f32 %v1415, %v1416
        %v1418 = vrot.slane %v1417, 1
        %v1419 = vmax.f32 %v1417, %v1418
        %v1420 = vmax.f32 %v1383, %v1384
        %v1421 = vrot.slane %v1420, 4
        %v1422 = vmax.f32 %v1420, %v1421
        %v1423 = vrot.slane %v1422, 2
        %v1424 = vmax.f32 %v1422, %v1423
        %v1425 = vrot.slane %v1424, 1
        %v1426 = vmax.f32 %v1424, %v1425
        %v1427 = vmax.f32 %v1385, %v1386
        %v1428 = vrot.slane %v1427, 4
        %v1429 = vmax.f32 %v1427, %v1428
        %v1430 = vrot.slane %v1429, 2
        %v1431 = vmax.f32 %v1429, %v1430
        %v1432 = vrot.slane %v1431, 1
        %v1433 = vmax.f32 %v1431, %v1432
        %v1434 = vmax.f32 %v1387, %v1388
        %v1435 = vrot.slane %v1434, 4
        %v1436 = vmax.f32 %v1434, %v1435
        %v1437 = vrot.slane %v1436, 2
        %v1438 = vmax.f32 %v1436, %v1437
        %v1439 = vrot.slane %v1438, 1
        %v1440 = vmax.f32 %v1438, %v1439
        %v1441 = vmax.f32 %v1389, %v1390
        %v1442 = vrot.slane %v1441, 4
        %v1443 = vmax.f32 %v1441, %v1442
        %v1444 = vrot.slane %v1443, 2
        %v1445 = vmax.f32 %v1443, %v1444
        %v1446 = vrot.slane %v1445, 1
        %v1447 = vmax.f32 %v1445, %v1446
        %v1448 = vmax.f32 %v1391, %v1392
        %v1449 = vrot.slane %v1448, 4
        %v1450 = vmax.f32 %v1448, %v1449
        %v1451 = vrot.slane %v1450, 2
        %v1452 = vmax.f32 %v1450, %v1451
        %v1453 = vrot.slane %v1452, 1
        %v1454 = vmax.f32 %v1452, %v1453
        %v1455 = vmax.f32 %v1393, %v1394
        %v1456 = vrot.slane %v1455, 4
        %v1457 = vmax.f32 %v1455, %v1456
        %v1458 = vrot.slane %v1457, 2
        %v1459 = vmax.f32 %v1457, %v1458
        %v1460 = vrot.slane %v1459, 1
        %v1461 = vmax.f32 %v1459, %v1460
        %v1462 = vmax.f32 %v1395, %v1396
        %v1463 = vrot.slane %v1462, 4
        %v1464 = vmax.f32 %v1462, %v1463
        %v1465 = vrot.slane %v1464, 2
        %v1466 = vmax.f32 %v1464, %v1465
        %v1467 = vrot.slane %v1466, 1
        %v1468 = vmax.f32 %v1466, %v1467
        %v1469 = vmax.f32 %v1397, %v1398
        %v1470 = vrot.slane %v1469, 4
        %v1471 = vmax.f32 %v1469, %v1470
        %v1472 = vrot.slane %v1471, 2
        %v1473 = vmax.f32 %v1471, %v1472
        %v1474 = vrot.slane %v1473, 1
        %v1475 = vmax.f32 %v1473, %v1474
        %v1476 = vmax.f32 %v1399, %v1400
        %v1477 = vrot.slane %v1476, 4
        %v1478 = vmax.f32 %v1476, %v1477
        %v1479 = vrot.slane %v1478, 2
        %v1480 = vmax.f32 %v1478, %v1479
        %v1481 = vrot.slane %v1480, 1
        %v1482 = vmax.f32 %v1480, %v1481
        %v1483 = vmax.f32 %v1401, %v1402
        %v1484 = vrot.slane %v1483, 4
        %v1485 = vmax.f32 %v1483, %v1484
        %v1486 = vrot.slane %v1485, 2
        %v1487 = vmax.f32 %v1485, %v1486
        %v1488 = vrot.slane %v1487, 1
        %v1489 = vmax.f32 %v1487, %v1488
        %v1490 = vmax.f32 %v1403, %v1404
        %v1491 = vrot.slane %v1490, 4
        %v1492 = vmax.f32 %v1490, %v1491
        %v1493 = vrot.slane %v1492, 2
        %v1494 = vmax.f32 %v1492, %v1493
        %v1495 = vrot.slane %v1494, 1
        %v1496 = vmax.f32 %v1494, %v1495
        %v1497 = vmax.f32 %v1405, %v1406
        %v1498 = vrot.slane %v1497, 4
        %v1499 = vmax.f32 %v1497, %v1498
        %v1500 = vrot.slane %v1499, 2
        %v1501 = vmax.f32 %v1499, %v1500
        %v1502 = vrot.slane %v1501, 1
        %v1503 = vmax.f32 %v1501, %v1502
        %v1504 = vmax.f32 %v1407, %v1408
        %v1505 = vrot.slane %v1504, 4
        %v1506 = vmax.f32 %v1504, %v1505
        %v1507 = vrot.slane %v1506, 2
        %v1508 = vmax.f32 %v1506, %v1507
        %v1509 = vrot.slane %v1508, 1
        %v1510 = vmax.f32 %v1508, %v1509
        %v1511 = vmax.f32 %v1409, %v1410
        %v1512 = vrot.slane %v1511, 4
        %v1513 = vmax.f32 %v1511, %v1512
        %v1514 = vrot.slane %v1513, 2
        %v1515 = vmax.f32 %v1513, %v1514
        %v1516 = vrot.slane %v1515, 1
        %v1517 = vmax.f32 %v1515, %v1516
        %v1518 = vmax.f32 %v1411, %v1412
        %v1519 = vrot.slane %v1518, 4
        %v1520 = vmax.f32 %v1518, %v1519
        %v1521 = vrot.slane %v1520, 2
        %v1522 = vmax.f32 %v1520, %v1521
        %v1523 = vrot.slane %v1522, 1
        %v1524 = vmax.f32 %v1522, %v1523
        %v1525 = vld [vmem:[%s4] sm:$0xff]
        %v1526 = vld [vmem:[%s4 + $0x8] sm:$0xff]
        %v1527 = vld [vmem:[%s4 + $0x10] sm:$0xff]
        %v1528 = vld [vmem:[%s4 + $0x18] sm:$0xff]
        %v1529 = vld [vmem:[%s4 + $0x20] sm:$0xff]
        %v1530 = vld [vmem:[%s4 + $0x28] sm:$0xff]
        %v1531 = vld [vmem:[%s4 + $0x30] sm:$0xff]
        %v1532 = vld [vmem:[%s4 + $0x38] sm:$0xff]
        %v1533 = vld [vmem:[%s4 + $0x40] sm:$0xff]
        %v1534 = vld [vmem:[%s4 + $0x48] sm:$0xff]
        %v1535 = vld [vmem:[%s4 + $0x50] sm:$0xff]
        %v1536 = vld [vmem:[%s4 + $0x58] sm:$0xff]
        %v1537 = vld [vmem:[%s4 + $0x60] sm:$0xff]
        %v1538 = vld [vmem:[%s4 + $0x68] sm:$0xff]
        %v1539 = vld [vmem:[%s4 + $0x70] sm:$0xff]
        %v1540 = vld [vmem:[%s4 + $0x78] sm:$0xff]
        %v1541 = vld [vmem:[%s5] sm:$0x1]
        %v1543 = vperm.slane %v1541, 0
        %vm1561 = vcmask 1041409
        %v1562 = vsel %vm1561, %v1426, %v1419
        %vm1563 = vcmask 1042434
        %v1564 = vsel %vm1563, %v1433, %v1562
        %vm1565 = vcmask 1043459
        %v1566 = vsel %vm1565, %v1440, %v1564
        %vm1567 = vcmask 1044484
        %v1568 = vsel %vm1567, %v1447, %v1566
        %vm1569 = vcmask 1045509
        %v1570 = vsel %vm1569, %v1454, %v1568
        %vm1571 = vcmask 1046534
        %v1572 = vsel %vm1571, %v1461, %v1570
        %vm1573 = vcmask 1047559
        %v1574 = vsel %vm1573, %v1468, %v1572
        %v1575 = vsel %vm1561, %v1482, %v1475
        %v1576 = vsel %vm1563, %v1489, %v1575
        %v1577 = vsel %vm1565, %v1496, %v1576
        %v1578 = vsel %vm1567, %v1503, %v1577
        %v1579 = vsel %vm1569, %v1510, %v1578
        %v1580 = vsel %vm1571, %v1517, %v1579
        %v1581 = vsel %vm1573, %v1524, %v1580
        %1584 = vmatpush.msra.mxu0 %v1540
        %1585 = vmatpush.msra.mxu0 %v1539
        %1586 = vmatpush.msra.mxu0 %v1538
        %1587 = vmatpush.msra.mxu0 %v1537
        %1588 = vmatpush.msra.mxu0 %v1536
        %1589 = vmatpush.msra.mxu0 %v1535
        %1590 = vmatpush.msra.mxu0 %v1534
        %1591 = vmatpush.msra.mxu0 %v1533
        %1592 = vmatpush.msra.mxu0 %v1532
        %1593 = vmatpush.msra.mxu0 %v1531
        %1594 = vmatpush.msra.mxu0 %v1530
        %1595 = vmatpush.msra.mxu0 %v1529
        %1596 = vmatpush.msra.mxu0 %v1528
        %1597 = vmatpush.msra.mxu0 %v1527
        %1598 = vmatpush.msra.mxu0 %v1526
        %1599 = vmatpush.msra.mxu0 %v1525
        %1600 = vmatmul.f32.gmra.mxu0 %v1574
        %v1601 = vpop.f32.mrf.mxu0
        %v1602 = vadd.f32 %v1543, %v1601
        %1603 = vmatmul.f32.gmra.mxu0 %v1581
        %v1604 = vpop.f32.mrf.mxu0
        %v1605 = vadd.f32 %v1543, %v1604
        %1606 = vdwg.mxu0
        %1607 = vst [vmem:[%s247] sm:$0xff] %v1602
        %1608 = vst [vmem:[%s247 + $0x8] sm:$0xff] %v1605
        %s1609 = sand.u32 %s159, 1
        %s1610 = scalar_lea.sflag [#allocation3], %s1609
        %s1611 = sand.u32 %s159, 1
        %s1612 = smul.addr %s1611, 16
        %s1613 = scalar_lea.vmem [#allocation2], %s1612
        // Predicated region
        $region45: #{tpu_custom_call.1} parent=43 // pred_check
          %p1614 = pneg %p169
        $region46: #{tpu_custom_call.1} parent=43 // pred_check_branch
          %1616 = sbr.rel (%p1614) target = $region48
        $region47: #{tpu_custom_call.1} parent=43 // pred_region
          %s1617 = smul.u32 2, %s20
          %1619 = vsyncadd %s1610, 0
          %s1620 = smul.addr %s1617, 8
          %s1621 = scalar_lea.hbm %s6, %s1620
          %s1622 = sshll.u32 %s1613, 4
          %s1623 = int_to_ptr.vmem [resolvable:$true] %s1622
          %s1624 = sshll.u32 %s1621, 4
          %s1625 = int_to_ptr.hbm [resolvable:$true] %s1624
          %1630 = dma.vmem_to_hbm [thread:$0]  %s1623, 256, %s1625, %s1610, 128, 128, 8
        $region48: #{tpu_custom_call.1} parent=43 // pred_fallthru
          _
      $region44: #{tpu_custom_call.1} parent=5 // pred_fallthru
        _
      %p1631 = scmp.le.s32.totalorder 2, %s15
      // Predicated region
      $region49: #{tpu_custom_call.1} parent=5 // pred_check
        %p1632 = pneg %p1631
      $region50: #{tpu_custom_call.1} parent=5 // pred_check_branch
        %1634 = sbr.rel (%p1632) target = $region52
      $region51: #{tpu_custom_call.1} parent=5 // pred_region
        %s1635 = ssub.s32 %s15, 2
        // Predicated region
        $region53: #{tpu_custom_call.1} parent=51 // pred_check
          %p1636 = pneg %p175
        $region54: #{tpu_custom_call.1} parent=51 // pred_check_branch
          %1638 = sbr.rel (%p1636) target = $region56
        $region55: #{tpu_custom_call.1} parent=51 // pred_region
          %s1639 = sand.u32 %s160, 1
          %s1640 = scalar_lea.sflag [#allocation3], %s1639
          %s1641 = sand.u32 %s160, 1
          %s1642 = smul.addr %s1641, 16
          %s1643 = scalar_lea.vmem [#allocation2], %s1642
          %1645 = dma.done %s1640, 256
        $region56: #{tpu_custom_call.1} parent=51 // pred_fallthru
          _
      $region52: #{tpu_custom_call.1} parent=5 // pred_fallthru
        _
    $region6: #{tpu_custom_call.1} parent=1 // loop_footer
      %s19 = sadd.s32 1, %s15
    $region7: #{tpu_custom_call.1} parent=1 // loop_footer_branch
      %14 = sbr.rel target = $region3
    $region8: #{tpu_custom_call.1} parent=1 // loop_exit
      _
    %1646 = vsyncpa [#allocation3], 1
    %s1647 = scalar_lea.sflag [#allocation3], 1
    %1648 = vsyncpa %s1647, 1

</llo_original>
